<compile_context>
chip_gen: v7x
topology: tpu7x:2x2x1
jax: 0.10.0
libtpu: 0.0.40
codegen_flags: <defaults>
</compile_context>

<pallas_src>
import jax
import jax.numpy as jnp
from jax.experimental import pallas as pl
from jax.experimental.pallas import tpu as pltpu


def _gather_rows_kernel(idx_ref, pts_hbm, out_ref, slab_ref, sem_ref):
    # idx_ref  : SMEM, (num_chunks * TN,) int32 scalar-prefetched row indices
    # pts_hbm  : HBM (pl.ANY), (N, B*D) lane-dense point rows
    # out_ref  : VMEM output block, (TN, B*D)
    # slab_ref : VMEM scratch,      (TN, B*D)
    # sem_ref  : DMA semaphores,    (TN,)
    tn, _ = slab_ref.shape
    base = pl.program_id(0) * tn

    # Issue all TN row DMAs up front so their HBM latencies overlap.
    def _issue(j, carry):
        row = idx_ref[base + j]
        pltpu.make_async_copy(
            pts_hbm.at[pl.ds(row, 1), :],
            slab_ref.at[pl.ds(j, 1), :],
            sem_ref.at[j],
        ).start()
        return carry

    jax.lax.fori_loop(0, tn, _issue, 0, unroll=True)

    # Wait for all of them (same-shaped dummy source descriptor for the wait).
    def _wait(j, carry):
        pltpu.make_async_copy(
            pts_hbm.at[pl.ds(0, 1), :],
            slab_ref.at[pl.ds(j, 1), :],
            sem_ref.at[j],
        ).wait()
        return carry

    jax.lax.fori_loop(0, tn, _wait, 0, unroll=True)

    # Single dense block store; Pallas pipelines the HBM writeback and drops
    # any out-of-bounds rows of a partial final chunk.
    out_ref[...] = slab_ref[...]


def trained_dropout_forward(points, dropout_weights, retain_fraction=0.5,
                            chunk_rows=32):
    B, N, D = points.shape
    num_retain = int(N * retain_fraction)  # same truncation as the PyTorch module

    # --- glue: sigmoid + top-k selection of retained rows -------------------
    # TODO(synk): top-k / sort has no Pallas TPU primitive; computed with
    # jax.lax.top_k in the wrapper.  Indices are sorted ascending to reproduce
    # the boolean-mask gather ordering (points[keep_mask]) of the reference.
    probabilities = jax.nn.sigmoid(dropout_weights)
    _, indices = jax.lax.top_k(probabilities, num_retain)
    indices = jnp.sort(indices).astype(jnp.int32)

    # --- lane-dense layout: one contiguous row of B*D values per point ------
    row_len = B * D
    pts2d = jnp.transpose(points, (1, 0, 2)).reshape(N, row_len)

    # Chunk size along retained rows: multiple of 8 sublanes, or the whole
    # output if it is small (then it equals the full output dim, also legal).
    if num_retain <= chunk_rows:
        tn = num_retain
    else:
        tn = max(8, (chunk_rows // 8) * 8)
    num_chunks = pl.cdiv(num_retain, tn)

    # Pad indices so every chunk reads tn valid (in-bounds) indices; rows
    # gathered for the padding land in the out-of-bounds part of the last
    # output block and are dropped by Pallas on writeback.
    pad = num_chunks * tn - num_retain
    if pad:
        indices = jnp.pad(indices, (0, pad), mode="edge")

    grid_spec = pltpu.PrefetchScalarGridSpec(
        num_scalar_prefetch=1,                       # `indices` lands in SMEM
        grid=(num_chunks,),
        in_specs=[pl.BlockSpec(memory_space=pl.ANY)],  # points stay in HBM
        out_specs=pl.BlockSpec((tn, row_len), lambda c, idx: (c, 0)),
        scratch_shapes=[
            pltpu.VMEM((tn, row_len), points.dtype),
            pltpu.SemaphoreType.DMA((tn,)),
        ],
    )

    out2d = pl.pallas_call(
        _gather_rows_kernel,
        out_shape=jax.ShapeDtypeStruct((num_retain, row_len), points.dtype),
        grid_spec=grid_spec,
        compiler_params=pltpu.CompilerParams(
            dimension_semantics=("parallel",),   # v7x: shard chunks across 2 TCs
            vmem_limit_bytes=32 << 20,           # fits every generation (v7x: 64 MiB phys)
        ),
    )(indices, pts2d)

    # Back to (B, num_retain, D).
    return jnp.transpose(out2d.reshape(num_retain, B, D), (1, 0, 2))


if __name__ == "__main__":
    # Small shapes consistent with the module: batch=2, num_points=64, feat=8.
    B, N, D = 2, 64, 8
    retain_fraction = 0.5

    key = jax.random.PRNGKey(0)
    k_pts, k_w = jax.random.split(key)
    points = jax.random.normal(k_pts, (B, N, D), dtype=jnp.float32)

    # Module __init__ uses torch.full((num_points,), 0.5).  A tiny deterministic
    # perturbation makes the top-k selection well defined (ties in a constant
    # vector are implementation-dependent).
    dropout_weights = jnp.full((N,), 0.5, dtype=jnp.float32) + \
        0.01 * jax.random.normal(k_w, (N,), dtype=jnp.float32)

    # chunk_rows=16 -> 2 grid steps of 16 retained rows each (exercises chunking).
    out = trained_dropout_forward(points, dropout_weights, retain_fraction,
                                  chunk_rows=16)
    out = jax.block_until_ready(out)

    # Pure-JAX reference reproducing the PyTorch semantics.
    num_retain = int(N * retain_fraction)
    probs = jax.nn.sigmoid(dropout_weights)
    _, ref_idx = jax.lax.top_k(probs, num_retain)
    ref_idx = jnp.sort(ref_idx)              # boolean-mask gather keeps original order
    ref = points[:, ref_idx, :]

    assert out.shape == (B, num_retain, D), out.shape
    assert jnp.allclose(out, ref), "mismatch vs reference gather"
    print("KERNEL_OK")
</pallas_src>

<mosaic_0001>
module attributes {stable_mosaic.version = 11 : i64} {
  func.func @_gather_rows_kernel(%arg0: i32, %arg1: memref<32xi32, #tpu.memory_space<smem>>, %arg2: memref<64x16xf32, #tpu.memory_space<any>>, %arg3: memref<16x16xf32, #tpu.memory_space<vmem>>, %arg4: memref<16x16xf32, #tpu.memory_space<vmem>>, %arg5: memref<16x!tpu.dma_semaphore, #tpu.memory_space<semaphore_mem>>) attributes {dimension_semantics = [#tpu.dimension_semantics<parallel>], iteration_bounds = array<i64: 2>, scalar_prefetch = 1 : i64, scratch_operands = 2 : i64, tpu.core_type = #tpu.core_type<tc>, window_params = [{}, {transform_indices = @transform_1, window_bounds = array<i64: 16, 16>}]} {
    %c16_i32 = arith.constant 16 : i32
    %0 = arith.muli %arg0, %c16_i32 : i32
    %c0_i32 = arith.constant 0 : i32
    %1 = arith.addi %0, %c0_i32 : i32
    %2 = arith.index_cast %1 : i32 to index
    %3 = memref.load %arg1[%2] : memref<32xi32, #tpu.memory_space<smem>>
    %c0_i32_0 = arith.constant 0 : i32
    %4 = tpu.memref_slice %arg2[%3, %c0_i32_0] : memref<64x16xf32, #tpu.memory_space<any>> -> memref<1x16xf32, #tpu.memory_space<any>>
    %c0_i32_1 = arith.constant 0 : i32
    %5 = tpu.memref_slice %arg4[%c0_i32, %c0_i32_1] : memref<16x16xf32, #tpu.memory_space<vmem>> -> memref<1x16xf32, #tpu.memory_space<vmem>>
    %6 = tpu.memref_slice %arg5[%c0_i32] : memref<16x!tpu.dma_semaphore, #tpu.memory_space<semaphore_mem>> -> memref<1x!tpu.dma_semaphore, #tpu.memory_space<semaphore_mem>>
    %7 = tpu.memref_squeeze %6 : memref<1x!tpu.dma_semaphore, #tpu.memory_space<semaphore_mem>> -> memref<!tpu.dma_semaphore, #tpu.memory_space<semaphore_mem>>
    tpu.enqueue_dma source(%4 : memref<1x16xf32, #tpu.memory_space<any>>) target(%5 : memref<1x16xf32, #tpu.memory_space<vmem>>) target_semaphore(%7 : memref<!tpu.dma_semaphore, #tpu.memory_space<semaphore_mem>>)
    %c1_i32 = arith.constant 1 : i32
    %8 = arith.addi %0, %c1_i32 : i32
    %9 = arith.index_cast %8 : i32 to index
    %10 = memref.load %arg1[%9] : memref<32xi32, #tpu.memory_space<smem>>
    %c0_i32_2 = arith.constant 0 : i32
    %11 = tpu.memref_slice %arg2[%10, %c0_i32_2] : memref<64x16xf32, #tpu.memory_space<any>> -> memref<1x16xf32, #tpu.memory_space<any>>
    %c0_i32_3 = arith.constant 0 : i32
    %12 = tpu.memref_slice %arg4[%c1_i32, %c0_i32_3] : memref<16x16xf32, #tpu.memory_space<vmem>> -> memref<1x16xf32, #tpu.memory_space<vmem>>
    %13 = tpu.memref_slice %arg5[%c1_i32] : memref<16x!tpu.dma_semaphore, #tpu.memory_space<semaphore_mem>> -> memref<1x!tpu.dma_semaphore, #tpu.memory_space<semaphore_mem>>
    %14 = tpu.memref_squeeze %13 : memref<1x!tpu.dma_semaphore, #tpu.memory_space<semaphore_mem>> -> memref<!tpu.dma_semaphore, #tpu.memory_space<semaphore_mem>>
    tpu.enqueue_dma source(%11 : memref<1x16xf32, #tpu.memory_space<any>>) target(%12 : memref<1x16xf32, #tpu.memory_space<vmem>>) target_semaphore(%14 : memref<!tpu.dma_semaphore, #tpu.memory_space<semaphore_mem>>)
    %c2_i32 = arith.constant 2 : i32
    %15 = arith.addi %0, %c2_i32 : i32
    %16 = arith.index_cast %15 : i32 to index
    %17 = memref.load %arg1[%16] : memref<32xi32, #tpu.memory_space<smem>>
    %c0_i32_4 = arith.constant 0 : i32
    %18 = tpu.memref_slice %arg2[%17, %c0_i32_4] : memref<64x16xf32, #tpu.memory_space<any>> -> memref<1x16xf32, #tpu.memory_space<any>>
    %c0_i32_5 = arith.constant 0 : i32
    %19 = tpu.memref_slice %arg4[%c2_i32, %c0_i32_5] : memref<16x16xf32, #tpu.memory_space<vmem>> -> memref<1x16xf32, #tpu.memory_space<vmem>>
    %20 = tpu.memref_slice %arg5[%c2_i32] : memref<16x!tpu.dma_semaphore, #tpu.memory_space<semaphore_mem>> -> memref<1x!tpu.dma_semaphore, #tpu.memory_space<semaphore_mem>>
    %21 = tpu.memref_squeeze %20 : memref<1x!tpu.dma_semaphore, #tpu.memory_space<semaphore_mem>> -> memref<!tpu.dma_semaphore, #tpu.memory_space<semaphore_mem>>
    tpu.enqueue_dma source(%18 : memref<1x16xf32, #tpu.memory_space<any>>) target(%19 : memref<1x16xf32, #tpu.memory_space<vmem>>) target_semaphore(%21 : memref<!tpu.dma_semaphore, #tpu.memory_space<semaphore_mem>>)
    %c3_i32 = arith.constant 3 : i32
    %22 = arith.addi %0, %c3_i32 : i32
    %23 = arith.index_cast %22 : i32 to index
    %24 = memref.load %arg1[%23] : memref<32xi32, #tpu.memory_space<smem>>
    %c0_i32_6 = arith.constant 0 : i32
    %25 = tpu.memref_slice %arg2[%24, %c0_i32_6] : memref<64x16xf32, #tpu.memory_space<any>> -> memref<1x16xf32, #tpu.memory_space<any>>
    %c0_i32_7 = arith.constant 0 : i32
    %26 = tpu.memref_slice %arg4[%c3_i32, %c0_i32_7] : memref<16x16xf32, #tpu.memory_space<vmem>> -> memref<1x16xf32, #tpu.memory_space<vmem>>
    %27 = tpu.memref_slice %arg5[%c3_i32] : memref<16x!tpu.dma_semaphore, #tpu.memory_space<semaphore_mem>> -> memref<1x!tpu.dma_semaphore, #tpu.memory_space<semaphore_mem>>
    %28 = tpu.memref_squeeze %27 : memref<1x!tpu.dma_semaphore, #tpu.memory_space<semaphore_mem>> -> memref<!tpu.dma_semaphore, #tpu.memory_space<semaphore_mem>>
    tpu.enqueue_dma source(%25 : memref<1x16xf32, #tpu.memory_space<any>>) target(%26 : memref<1x16xf32, #tpu.memory_space<vmem>>) target_semaphore(%28 : memref<!tpu.dma_semaphore, #tpu.memory_space<semaphore_mem>>)
    %c4_i32 = arith.constant 4 : i32
    %29 = arith.addi %0, %c4_i32 : i32
    %30 = arith.index_cast %29 : i32 to index
    %31 = memref.load %arg1[%30] : memref<32xi32, #tpu.memory_space<smem>>
    %c0_i32_8 = arith.constant 0 : i32
    %32 = tpu.memref_slice %arg2[%31, %c0_i32_8] : memref<64x16xf32, #tpu.memory_space<any>> -> memref<1x16xf32, #tpu.memory_space<any>>
    %c0_i32_9 = arith.constant 0 : i32
    %33 = tpu.memref_slice %arg4[%c4_i32, %c0_i32_9] : memref<16x16xf32, #tpu.memory_space<vmem>> -> memref<1x16xf32, #tpu.memory_space<vmem>>
    %34 = tpu.memref_slice %arg5[%c4_i32] : memref<16x!tpu.dma_semaphore, #tpu.memory_space<semaphore_mem>> -> memref<1x!tpu.dma_semaphore, #tpu.memory_space<semaphore_mem>>
    %35 = tpu.memref_squeeze %34 : memref<1x!tpu.dma_semaphore, #tpu.memory_space<semaphore_mem>> -> memref<!tpu.dma_semaphore, #tpu.memory_space<semaphore_mem>>
    tpu.enqueue_dma source(%32 : memref<1x16xf32, #tpu.memory_space<any>>) target(%33 : memref<1x16xf32, #tpu.memory_space<vmem>>) target_semaphore(%35 : memref<!tpu.dma_semaphore, #tpu.memory_space<semaphore_mem>>)
    %c5_i32 = arith.constant 5 : i32
    %36 = arith.addi %0, %c5_i32 : i32
    %37 = arith.index_cast %36 : i32 to index
    %38 = memref.load %arg1[%37] : memref<32xi32, #tpu.memory_space<smem>>
    %c0_i32_10 = arith.constant 0 : i32
    %39 = tpu.memref_slice %arg2[%38, %c0_i32_10] : memref<64x16xf32, #tpu.memory_space<any>> -> memref<1x16xf32, #tpu.memory_space<any>>
    %c0_i32_11 = arith.constant 0 : i32
    %40 = tpu.memref_slice %arg4[%c5_i32, %c0_i32_11] : memref<16x16xf32, #tpu.memory_space<vmem>> -> memref<1x16xf32, #tpu.memory_space<vmem>>
    %41 = tpu.memref_slice %arg5[%c5_i32] : memref<16x!tpu.dma_semaphore, #tpu.memory_space<semaphore_mem>> -> memref<1x!tpu.dma_semaphore, #tpu.memory_space<semaphore_mem>>
    %42 = tpu.memref_squeeze %41 : memref<1x!tpu.dma_semaphore, #tpu.memory_space<semaphore_mem>> -> memref<!tpu.dma_semaphore, #tpu.memory_space<semaphore_mem>>
    tpu.enqueue_dma source(%39 : memref<1x16xf32, #tpu.memory_space<any>>) target(%40 : memref<1x16xf32, #tpu.memory_space<vmem>>) target_semaphore(%42 : memref<!tpu.dma_semaphore, #tpu.memory_space<semaphore_mem>>)
    %c6_i32 = arith.constant 6 : i32
    %43 = arith.addi %0, %c6_i32 : i32
    %44 = arith.index_cast %43 : i32 to index
    %45 = memref.load %arg1[%44] : memref<32xi32, #tpu.memory_space<smem>>
    %c0_i32_12 = arith.constant 0 : i32
    %46 = tpu.memref_slice %arg2[%45, %c0_i32_12] : memref<64x16xf32, #tpu.memory_space<any>> -> memref<1x16xf32, #tpu.memory_space<any>>
    %c0_i32_13 = arith.constant 0 : i32
    %47 = tpu.memref_slice %arg4[%c6_i32, %c0_i32_13] : memref<16x16xf32, #tpu.memory_space<vmem>> -> memref<1x16xf32, #tpu.memory_space<vmem>>
    %48 = tpu.memref_slice %arg5[%c6_i32] : memref<16x!tpu.dma_semaphore, #tpu.memory_space<semaphore_mem>> -> memref<1x!tpu.dma_semaphore, #tpu.memory_space<semaphore_mem>>
    %49 = tpu.memref_squeeze %48 : memref<1x!tpu.dma_semaphore, #tpu.memory_space<semaphore_mem>> -> memref<!tpu.dma_semaphore, #tpu.memory_space<semaphore_mem>>
    tpu.enqueue_dma source(%46 : memref<1x16xf32, #tpu.memory_space<any>>) target(%47 : memref<1x16xf32, #tpu.memory_space<vmem>>) target_semaphore(%49 : memref<!tpu.dma_semaphore, #tpu.memory_space<semaphore_mem>>)
    %c7_i32 = arith.constant 7 : i32
    %50 = arith.addi %0, %c7_i32 : i32
    %51 = arith.index_cast %50 : i32 to index
    %52 = memref.load %arg1[%51] : memref<32xi32, #tpu.memory_space<smem>>
    %c0_i32_14 = arith.constant 0 : i32
    %53 = tpu.memref_slice %arg2[%52, %c0_i32_14] : memref<64x16xf32, #tpu.memory_space<any>> -> memref<1x16xf32, #tpu.memory_space<any>>
    %c0_i32_15 = arith.constant 0 : i32
    %54 = tpu.memref_slice %arg4[%c7_i32, %c0_i32_15] : memref<16x16xf32, #tpu.memory_space<vmem>> -> memref<1x16xf32, #tpu.memory_space<vmem>>
    %55 = tpu.memref_slice %arg5[%c7_i32] : memref<16x!tpu.dma_semaphore, #tpu.memory_space<semaphore_mem>> -> memref<1x!tpu.dma_semaphore, #tpu.memory_space<semaphore_mem>>
    %56 = tpu.memref_squeeze %55 : memref<1x!tpu.dma_semaphore, #tpu.memory_space<semaphore_mem>> -> memref<!tpu.dma_semaphore, #tpu.memory_space<semaphore_mem>>
    tpu.enqueue_dma source(%53 : memref<1x16xf32, #tpu.memory_space<any>>) target(%54 : memref<1x16xf32, #tpu.memory_space<vmem>>) target_semaphore(%56 : memref<!tpu.dma_semaphore, #tpu.memory_space<semaphore_mem>>)
    %c8_i32 = arith.constant 8 : i32
    %57 = arith.addi %0, %c8_i32 : i32
    %58 = arith.index_cast %57 : i32 to index
    %59 = memref.load %arg1[%58] : memref<32xi32, #tpu.memory_space<smem>>
    %c0_i32_16 = arith.constant 0 : i32
    %60 = tpu.memref_slice %arg2[%59, %c0_i32_16] : memref<64x16xf32, #tpu.memory_space<any>> -> memref<1x16xf32, #tpu.memory_space<any>>
    %c0_i32_17 = arith.constant 0 : i32
    %61 = tpu.memref_slice %arg4[%c8_i32, %c0_i32_17] : memref<16x16xf32, #tpu.memory_space<vmem>> -> memref<1x16xf32, #tpu.memory_space<vmem>>
    %62 = tpu.memref_slice %arg5[%c8_i32] : memref<16x!tpu.dma_semaphore, #tpu.memory_space<semaphore_mem>> -> memref<1x!tpu.dma_semaphore, #tpu.memory_space<semaphore_mem>>
    %63 = tpu.memref_squeeze %62 : memref<1x!tpu.dma_semaphore, #tpu.memory_space<semaphore_mem>> -> memref<!tpu.dma_semaphore, #tpu.memory_space<semaphore_mem>>
    tpu.enqueue_dma source(%60 : memref<1x16xf32, #tpu.memory_space<any>>) target(%61 : memref<1x16xf32, #tpu.memory_space<vmem>>) target_semaphore(%63 : memref<!tpu.dma_semaphore, #tpu.memory_space<semaphore_mem>>)
    %c9_i32 = arith.constant 9 : i32
    %64 = arith.addi %0, %c9_i32 : i32
    %65 = arith.index_cast %64 : i32 to index
    %66 = memref.load %arg1[%65] : memref<32xi32, #tpu.memory_space<smem>>
    %c0_i32_18 = arith.constant 0 : i32
    %67 = tpu.memref_slice %arg2[%66, %c0_i32_18] : memref<64x16xf32, #tpu.memory_space<any>> -> memref<1x16xf32, #tpu.memory_space<any>>
    %c0_i32_19 = arith.constant 0 : i32
    %68 = tpu.memref_slice %arg4[%c9_i32, %c0_i32_19] : memref<16x16xf32, #tpu.memory_space<vmem>> -> memref<1x16xf32, #tpu.memory_space<vmem>>
    %69 = tpu.memref_slice %arg5[%c9_i32] : memref<16x!tpu.dma_semaphore, #tpu.memory_space<semaphore_mem>> -> memref<1x!tpu.dma_semaphore, #tpu.memory_space<semaphore_mem>>
    %70 = tpu.memref_squeeze %69 : memref<1x!tpu.dma_semaphore, #tpu.memory_space<semaphore_mem>> -> memref<!tpu.dma_semaphore, #tpu.memory_space<semaphore_mem>>
    tpu.enqueue_dma source(%67 : memref<1x16xf32, #tpu.memory_space<any>>) target(%68 : memref<1x16xf32, #tpu.memory_space<vmem>>) target_semaphore(%70 : memref<!tpu.dma_semaphore, #tpu.memory_space<semaphore_mem>>)
    %c10_i32 = arith.constant 10 : i32
    %71 = arith.addi %0, %c10_i32 : i32
    %72 = arith.index_cast %71 : i32 to index
    %73 = memref.load %arg1[%72] : memref<32xi32, #tpu.memory_space<smem>>
    %c0_i32_20 = arith.constant 0 : i32
    %74 = tpu.memref_slice %arg2[%73, %c0_i32_20] : memref<64x16xf32, #tpu.memory_space<any>> -> memref<1x16xf32, #tpu.memory_space<any>>
    %c0_i32_21 = arith.constant 0 : i32
    %75 = tpu.memref_slice %arg4[%c10_i32, %c0_i32_21] : memref<16x16xf32, #tpu.memory_space<vmem>> -> memref<1x16xf32, #tpu.memory_space<vmem>>
    %76 = tpu.memref_slice %arg5[%c10_i32] : memref<16x!tpu.dma_semaphore, #tpu.memory_space<semaphore_mem>> -> memref<1x!tpu.dma_semaphore, #tpu.memory_space<semaphore_mem>>
    %77 = tpu.memref_squeeze %76 : memref<1x!tpu.dma_semaphore, #tpu.memory_space<semaphore_mem>> -> memref<!tpu.dma_semaphore, #tpu.memory_space<semaphore_mem>>
    tpu.enqueue_dma source(%74 : memref<1x16xf32, #tpu.memory_space<any>>) target(%75 : memref<1x16xf32, #tpu.memory_space<vmem>>) target_semaphore(%77 : memref<!tpu.dma_semaphore, #tpu.memory_space<semaphore_mem>>)
    %c11_i32 = arith.constant 11 : i32
    %78 = arith.addi %0, %c11_i32 : i32
    %79 = arith.index_cast %78 : i32 to index
    %80 = memref.load %arg1[%79] : memref<32xi32, #tpu.memory_space<smem>>
    %c0_i32_22 = arith.constant 0 : i32
    %81 = tpu.memref_slice %arg2[%80, %c0_i32_22] : memref<64x16xf32, #tpu.memory_space<any>> -> memref<1x16xf32, #tpu.memory_space<any>>
    %c0_i32_23 = arith.constant 0 : i32
    %82 = tpu.memref_slice %arg4[%c11_i32, %c0_i32_23] : memref<16x16xf32, #tpu.memory_space<vmem>> -> memref<1x16xf32, #tpu.memory_space<vmem>>
    %83 = tpu.memref_slice %arg5[%c11_i32] : memref<16x!tpu.dma_semaphore, #tpu.memory_space<semaphore_mem>> -> memref<1x!tpu.dma_semaphore, #tpu.memory_space<semaphore_mem>>
    %84 = tpu.memref_squeeze %83 : memref<1x!tpu.dma_semaphore, #tpu.memory_space<semaphore_mem>> -> memref<!tpu.dma_semaphore, #tpu.memory_space<semaphore_mem>>
    tpu.enqueue_dma source(%81 : memref<1x16xf32, #tpu.memory_space<any>>) target(%82 : memref<1x16xf32, #tpu.memory_space<vmem>>) target_semaphore(%84 : memref<!tpu.dma_semaphore, #tpu.memory_space<semaphore_mem>>)
    %c12_i32 = arith.constant 12 : i32
    %85 = arith.addi %0, %c12_i32 : i32
    %86 = arith.index_cast %85 : i32 to index
    %87 = memref.load %arg1[%86] : memref<32xi32, #tpu.memory_space<smem>>
    %c0_i32_24 = arith.constant 0 : i32
    %88 = tpu.memref_slice %arg2[%87, %c0_i32_24] : memref<64x16xf32, #tpu.memory_space<any>> -> memref<1x16xf32, #tpu.memory_space<any>>
    %c0_i32_25 = arith.constant 0 : i32
    %89 = tpu.memref_slice %arg4[%c12_i32, %c0_i32_25] : memref<16x16xf32, #tpu.memory_space<vmem>> -> memref<1x16xf32, #tpu.memory_space<vmem>>
    %90 = tpu.memref_slice %arg5[%c12_i32] : memref<16x!tpu.dma_semaphore, #tpu.memory_space<semaphore_mem>> -> memref<1x!tpu.dma_semaphore, #tpu.memory_space<semaphore_mem>>
    %91 = tpu.memref_squeeze %90 : memref<1x!tpu.dma_semaphore, #tpu.memory_space<semaphore_mem>> -> memref<!tpu.dma_semaphore, #tpu.memory_space<semaphore_mem>>
    tpu.enqueue_dma source(%88 : memref<1x16xf32, #tpu.memory_space<any>>) target(%89 : memref<1x16xf32, #tpu.memory_space<vmem>>) target_semaphore(%91 : memref<!tpu.dma_semaphore, #tpu.memory_space<semaphore_mem>>)
    %c13_i32 = arith.constant 13 : i32
    %92 = arith.addi %0, %c13_i32 : i32
    %93 = arith.index_cast %92 : i32 to index
    %94 = memref.load %arg1[%93] : memref<32xi32, #tpu.memory_space<smem>>
    %c0_i32_26 = arith.constant 0 : i32
    %95 = tpu.memref_slice %arg2[%94, %c0_i32_26] : memref<64x16xf32, #tpu.memory_space<any>> -> memref<1x16xf32, #tpu.memory_space<any>>
    %c0_i32_27 = arith.constant 0 : i32
    %96 = tpu.memref_slice %arg4[%c13_i32, %c0_i32_27] : memref<16x16xf32, #tpu.memory_space<vmem>> -> memref<1x16xf32, #tpu.memory_space<vmem>>
    %97 = tpu.memref_slice %arg5[%c13_i32] : memref<16x!tpu.dma_semaphore, #tpu.memory_space<semaphore_mem>> -> memref<1x!tpu.dma_semaphore, #tpu.memory_space<semaphore_mem>>
    %98 = tpu.memref_squeeze %97 : memref<1x!tpu.dma_semaphore, #tpu.memory_space<semaphore_mem>> -> memref<!tpu.dma_semaphore, #tpu.memory_space<semaphore_mem>>
    tpu.enqueue_dma source(%95 : memref<1x16xf32, #tpu.memory_space<any>>) target(%96 : memref<1x16xf32, #tpu.memory_space<vmem>>) target_semaphore(%98 : memref<!tpu.dma_semaphore, #tpu.memory_space<semaphore_mem>>)
    %c14_i32 = arith.constant 14 : i32
    %99 = arith.addi %0, %c14_i32 : i32
    %100 = arith.index_cast %99 : i32 to index
    %101 = memref.load %arg1[%100] : memref<32xi32, #tpu.memory_space<smem>>
    %c0_i32_28 = arith.constant 0 : i32
    %102 = tpu.memref_slice %arg2[%101, %c0_i32_28] : memref<64x16xf32, #tpu.memory_space<any>> -> memref<1x16xf32, #tpu.memory_space<any>>
    %c0_i32_29 = arith.constant 0 : i32
    %103 = tpu.memref_slice %arg4[%c14_i32, %c0_i32_29] : memref<16x16xf32, #tpu.memory_space<vmem>> -> memref<1x16xf32, #tpu.memory_space<vmem>>
    %104 = tpu.memref_slice %arg5[%c14_i32] : memref<16x!tpu.dma_semaphore, #tpu.memory_space<semaphore_mem>> -> memref<1x!tpu.dma_semaphore, #tpu.memory_space<semaphore_mem>>
    %105 = tpu.memref_squeeze %104 : memref<1x!tpu.dma_semaphore, #tpu.memory_space<semaphore_mem>> -> memref<!tpu.dma_semaphore, #tpu.memory_space<semaphore_mem>>
    tpu.enqueue_dma source(%102 : memref<1x16xf32, #tpu.memory_space<any>>) target(%103 : memref<1x16xf32, #tpu.memory_space<vmem>>) target_semaphore(%105 : memref<!tpu.dma_semaphore, #tpu.memory_space<semaphore_mem>>)
    %c15_i32 = arith.constant 15 : i32
    %106 = arith.addi %0, %c15_i32 : i32
    %107 = arith.index_cast %106 : i32 to index
    %108 = memref.load %arg1[%107] : memref<32xi32, #tpu.memory_space<smem>>
    %c0_i32_30 = arith.constant 0 : i32
    %109 = tpu.memref_slice %arg2[%108, %c0_i32_30] : memref<64x16xf32, #tpu.memory_space<any>> -> memref<1x16xf32, #tpu.memory_space<any>>
    %c0_i32_31 = arith.constant 0 : i32
    %110 = tpu.memref_slice %arg4[%c15_i32, %c0_i32_31] : memref<16x16xf32, #tpu.memory_space<vmem>> -> memref<1x16xf32, #tpu.memory_space<vmem>>
    %111 = tpu.memref_slice %arg5[%c15_i32] : memref<16x!tpu.dma_semaphore, #tpu.memory_space<semaphore_mem>> -> memref<1x!tpu.dma_semaphore, #tpu.memory_space<semaphore_mem>>
    %112 = tpu.memref_squeeze %111 : memref<1x!tpu.dma_semaphore, #tpu.memory_space<semaphore_mem>> -> memref<!tpu.dma_semaphore, #tpu.memory_space<semaphore_mem>>
    tpu.enqueue_dma source(%109 : memref<1x16xf32, #tpu.memory_space<any>>) target(%110 : memref<1x16xf32, #tpu.memory_space<vmem>>) target_semaphore(%112 : memref<!tpu.dma_semaphore, #tpu.memory_space<semaphore_mem>>)
    %c16_i32_32 = arith.constant 16 : i32
    %c0_i32_33 = arith.constant 0 : i32
    %c0_i32_34 = arith.constant 0 : i32
    %c0_i32_35 = arith.constant 0 : i32
    %113 = tpu.memref_slice %arg2[%c0_i32_34, %c0_i32_35] : memref<64x16xf32, #tpu.memory_space<any>> -> memref<1x16xf32, #tpu.memory_space<any>>
    %c0_i32_36 = arith.constant 0 : i32
    %114 = tpu.memref_slice %arg4[%c0_i32_33, %c0_i32_36] : memref<16x16xf32, #tpu.memory_space<vmem>> -> memref<1x16xf32, #tpu.memory_space<vmem>>
    %115 = tpu.memref_slice %arg5[%c0_i32_33] : memref<16x!tpu.dma_semaphore, #tpu.memory_space<semaphore_mem>> -> memref<1x!tpu.dma_semaphore, #tpu.memory_space<semaphore_mem>>
    %116 = tpu.memref_squeeze %115 : memref<1x!tpu.dma_semaphore, #tpu.memory_space<semaphore_mem>> -> memref<!tpu.dma_semaphore, #tpu.memory_space<semaphore_mem>>
    tpu.wait_dma2 semaphore(%116 : memref<!tpu.dma_semaphore, #tpu.memory_space<semaphore_mem>>) src(%113 : memref<1x16xf32, #tpu.memory_space<any>>) dst(%114 : memref<1x16xf32, #tpu.memory_space<vmem>>)
    %c1_i32_37 = arith.constant 1 : i32
    %c0_i32_38 = arith.constant 0 : i32
    %c0_i32_39 = arith.constant 0 : i32
    %117 = tpu.memref_slice %arg2[%c0_i32_38, %c0_i32_39] : memref<64x16xf32, #tpu.memory_space<any>> -> memref<1x16xf32, #tpu.memory_space<any>>
    %c0_i32_40 = arith.constant 0 : i32
    %118 = tpu.memref_slice %arg4[%c1_i32_37, %c0_i32_40] : memref<16x16xf32, #tpu.memory_space<vmem>> -> memref<1x16xf32, #tpu.memory_space<vmem>>
    %119 = tpu.memref_slice %arg5[%c1_i32_37] : memref<16x!tpu.dma_semaphore, #tpu.memory_space<semaphore_mem>> -> memref<1x!tpu.dma_semaphore, #tpu.memory_space<semaphore_mem>>
    %120 = tpu.memref_squeeze %119 : memref<1x!tpu.dma_semaphore, #tpu.memory_space<semaphore_mem>> -> memref<!tpu.dma_semaphore, #tpu.memory_space<semaphore_mem>>
    tpu.wait_dma2 semaphore(%120 : memref<!tpu.dma_semaphore, #tpu.memory_space<semaphore_mem>>) src(%117 : memref<1x16xf32, #tpu.memory_space<any>>) dst(%118 : memref<1x16xf32, #tpu.memory_space<vmem>>)
    %c2_i32_41 = arith.constant 2 : i32
    %c0_i32_42 = arith.constant 0 : i32
    %c0_i32_43 = arith.constant 0 : i32
    %121 = tpu.memref_slice %arg2[%c0_i32_42, %c0_i32_43] : memref<64x16xf32, #tpu.memory_space<any>> -> memref<1x16xf32, #tpu.memory_space<any>>
    %c0_i32_44 = arith.constant 0 : i32
    %122 = tpu.memref_slice %arg4[%c2_i32_41, %c0_i32_44] : memref<16x16xf32, #tpu.memory_space<vmem>> -> memref<1x16xf32, #tpu.memory_space<vmem>>
    %123 = tpu.memref_slice %arg5[%c2_i32_41] : memref<16x!tpu.dma_semaphore, #tpu.memory_space<semaphore_mem>> -> memref<1x!tpu.dma_semaphore, #tpu.memory_space<semaphore_mem>>
    %124 = tpu.memref_squeeze %123 : memref<1x!tpu.dma_semaphore, #tpu.memory_space<semaphore_mem>> -> memref<!tpu.dma_semaphore, #tpu.memory_space<semaphore_mem>>
    tpu.wait_dma2 semaphore(%124 : memref<!tpu.dma_semaphore, #tpu.memory_space<semaphore_mem>>) src(%121 : memref<1x16xf32, #tpu.memory_space<any>>) dst(%122 : memref<1x16xf32, #tpu.memory_space<vmem>>)
    %c3_i32_45 = arith.constant 3 : i32
    %c0_i32_46 = arith.constant 0 : i32
    %c0_i32_47 = arith.constant 0 : i32
    %125 = tpu.memref_slice %arg2[%c0_i32_46, %c0_i32_47] : memref<64x16xf32, #tpu.memory_space<any>> -> memref<1x16xf32, #tpu.memory_space<any>>
    %c0_i32_48 = arith.constant 0 : i32
    %126 = tpu.memref_slice %arg4[%c3_i32_45, %c0_i32_48] : memref<16x16xf32, #tpu.memory_space<vmem>> -> memref<1x16xf32, #tpu.memory_space<vmem>>
    %127 = tpu.memref_slice %arg5[%c3_i32_45] : memref<16x!tpu.dma_semaphore, #tpu.memory_space<semaphore_mem>> -> memref<1x!tpu.dma_semaphore, #tpu.memory_space<semaphore_mem>>
    %128 = tpu.memref_squeeze %127 : memref<1x!tpu.dma_semaphore, #tpu.memory_space<semaphore_mem>> -> memref<!tpu.dma_semaphore, #tpu.memory_space<semaphore_mem>>
    tpu.wait_dma2 semaphore(%128 : memref<!tpu.dma_semaphore, #tpu.memory_space<semaphore_mem>>) src(%125 : memref<1x16xf32, #tpu.memory_space<any>>) dst(%126 : memref<1x16xf32, #tpu.memory_space<vmem>>)
    %c4_i32_49 = arith.constant 4 : i32
    %c0_i32_50 = arith.constant 0 : i32
    %c0_i32_51 = arith.constant 0 : i32
    %129 = tpu.memref_slice %arg2[%c0_i32_50, %c0_i32_51] : memref<64x16xf32, #tpu.memory_space<any>> -> memref<1x16xf32, #tpu.memory_space<any>>
    %c0_i32_52 = arith.constant 0 : i32
    %130 = tpu.memref_slice %arg4[%c4_i32_49, %c0_i32_52] : memref<16x16xf32, #tpu.memory_space<vmem>> -> memref<1x16xf32, #tpu.memory_space<vmem>>
    %131 = tpu.memref_slice %arg5[%c4_i32_49] : memref<16x!tpu.dma_semaphore, #tpu.memory_space<semaphore_mem>> -> memref<1x!tpu.dma_semaphore, #tpu.memory_space<semaphore_mem>>
    %132 = tpu.memref_squeeze %131 : memref<1x!tpu.dma_semaphore, #tpu.memory_space<semaphore_mem>> -> memref<!tpu.dma_semaphore, #tpu.memory_space<semaphore_mem>>
    tpu.wait_dma2 semaphore(%132 : memref<!tpu.dma_semaphore, #tpu.memory_space<semaphore_mem>>) src(%129 : memref<1x16xf32, #tpu.memory_space<any>>) dst(%130 : memref<1x16xf32, #tpu.memory_space<vmem>>)
    %c5_i32_53 = arith.constant 5 : i32
    %c0_i32_54 = arith.constant 0 : i32
    %c0_i32_55 = arith.constant 0 : i32
    %133 = tpu.memref_slice %arg2[%c0_i32_54, %c0_i32_55] : memref<64x16xf32, #tpu.memory_space<any>> -> memref<1x16xf32, #tpu.memory_space<any>>
    %c0_i32_56 = arith.constant 0 : i32
    %134 = tpu.memref_slice %arg4[%c5_i32_53, %c0_i32_56] : memref<16x16xf32, #tpu.memory_space<vmem>> -> memref<1x16xf32, #tpu.memory_space<vmem>>
    %135 = tpu.memref_slice %arg5[%c5_i32_53] : memref<16x!tpu.dma_semaphore, #tpu.memory_space<semaphore_mem>> -> memref<1x!tpu.dma_semaphore, #tpu.memory_space<semaphore_mem>>
    %136 = tpu.memref_squeeze %135 : memref<1x!tpu.dma_semaphore, #tpu.memory_space<semaphore_mem>> -> memref<!tpu.dma_semaphore, #tpu.memory_space<semaphore_mem>>
    tpu.wait_dma2 semaphore(%136 : memref<!tpu.dma_semaphore, #tpu.memory_space<semaphore_mem>>) src(%133 : memref<1x16xf32, #tpu.memory_space<any>>) dst(%134 : memref<1x16xf32, #tpu.memory_space<vmem>>)
    %c6_i32_57 = arith.constant 6 : i32
    %c0_i32_58 = arith.constant 0 : i32
    %c0_i32_59 = arith.constant 0 : i32
    %137 = tpu.memref_slice %arg2[%c0_i32_58, %c0_i32_59] : memref<64x16xf32, #tpu.memory_space<any>> -> memref<1x16xf32, #tpu.memory_space<any>>
    %c0_i32_60 = arith.constant 0 : i32
    %138 = tpu.memref_slice %arg4[%c6_i32_57, %c0_i32_60] : memref<16x16xf32, #tpu.memory_space<vmem>> -> memref<1x16xf32, #tpu.memory_space<vmem>>
    %139 = tpu.memref_slice %arg5[%c6_i32_57] : memref<16x!tpu.dma_semaphore, #tpu.memory_space<semaphore_mem>> -> memref<1x!tpu.dma_semaphore, #tpu.memory_space<semaphore_mem>>
    %140 = tpu.memref_squeeze %139 : memref<1x!tpu.dma_semaphore, #tpu.memory_space<semaphore_mem>> -> memref<!tpu.dma_semaphore, #tpu.memory_space<semaphore_mem>>
    tpu.wait_dma2 semaphore(%140 : memref<!tpu.dma_semaphore, #tpu.memory_space<semaphore_mem>>) src(%137 : memref<1x16xf32, #tpu.memory_space<any>>) dst(%138 : memref<1x16xf32, #tpu.memory_space<vmem>>)
    %c7_i32_61 = arith.constant 7 : i32
    %c0_i32_62 = arith.constant 0 : i32
    %c0_i32_63 = arith.constant 0 : i32
    %141 = tpu.memref_slice %arg2[%c0_i32_62, %c0_i32_63] : memref<64x16xf32, #tpu.memory_space<any>> -> memref<1x16xf32, #tpu.memory_space<any>>
    %c0_i32_64 = arith.constant 0 : i32
    %142 = tpu.memref_slice %arg4[%c7_i32_61, %c0_i32_64] : memref<16x16xf32, #tpu.memory_space<vmem>> -> memref<1x16xf32, #tpu.memory_space<vmem>>
    %143 = tpu.memref_slice %arg5[%c7_i32_61] : memref<16x!tpu.dma_semaphore, #tpu.memory_space<semaphore_mem>> -> memref<1x!tpu.dma_semaphore, #tpu.memory_space<semaphore_mem>>
    %144 = tpu.memref_squeeze %143 : memref<1x!tpu.dma_semaphore, #tpu.memory_space<semaphore_mem>> -> memref<!tpu.dma_semaphore, #tpu.memory_space<semaphore_mem>>
    tpu.wait_dma2 semaphore(%144 : memref<!tpu.dma_semaphore, #tpu.memory_space<semaphore_mem>>) src(%141 : memref<1x16xf32, #tpu.memory_space<any>>) dst(%142 : memref<1x16xf32, #tpu.memory_space<vmem>>)
    %c8_i32_65 = arith.constant 8 : i32
    %c0_i32_66 = arith.constant 0 : i32
    %c0_i32_67 = arith.constant 0 : i32
    %145 = tpu.memref_slice %arg2[%c0_i32_66, %c0_i32_67] : memref<64x16xf32, #tpu.memory_space<any>> -> memref<1x16xf32, #tpu.memory_space<any>>
    %c0_i32_68 = arith.constant 0 : i32
    %146 = tpu.memref_slice %arg4[%c8_i32_65, %c0_i32_68] : memref<16x16xf32, #tpu.memory_space<vmem>> -> memref<1x16xf32, #tpu.memory_space<vmem>>
    %147 = tpu.memref_slice %arg5[%c8_i32_65] : memref<16x!tpu.dma_semaphore, #tpu.memory_space<semaphore_mem>> -> memref<1x!tpu.dma_semaphore, #tpu.memory_space<semaphore_mem>>
    %148 = tpu.memref_squeeze %147 : memref<1x!tpu.dma_semaphore, #tpu.memory_space<semaphore_mem>> -> memref<!tpu.dma_semaphore, #tpu.memory_space<semaphore_mem>>
    tpu.wait_dma2 semaphore(%148 : memref<!tpu.dma_semaphore, #tpu.memory_space<semaphore_mem>>) src(%145 : memref<1x16xf32, #tpu.memory_space<any>>) dst(%146 : memref<1x16xf32, #tpu.memory_space<vmem>>)
    %c9_i32_69 = arith.constant 9 : i32
    %c0_i32_70 = arith.constant 0 : i32
    %c0_i32_71 = arith.constant 0 : i32
    %149 = tpu.memref_slice %arg2[%c0_i32_70, %c0_i32_71] : memref<64x16xf32, #tpu.memory_space<any>> -> memref<1x16xf32, #tpu.memory_space<any>>
    %c0_i32_72 = arith.constant 0 : i32
    %150 = tpu.memref_slice %arg4[%c9_i32_69, %c0_i32_72] : memref<16x16xf32, #tpu.memory_space<vmem>> -> memref<1x16xf32, #tpu.memory_space<vmem>>
    %151 = tpu.memref_slice %arg5[%c9_i32_69] : memref<16x!tpu.dma_semaphore, #tpu.memory_space<semaphore_mem>> -> memref<1x!tpu.dma_semaphore, #tpu.memory_space<semaphore_mem>>
    %152 = tpu.memref_squeeze %151 : memref<1x!tpu.dma_semaphore, #tpu.memory_space<semaphore_mem>> -> memref<!tpu.dma_semaphore, #tpu.memory_space<semaphore_mem>>
    tpu.wait_dma2 semaphore(%152 : memref<!tpu.dma_semaphore, #tpu.memory_space<semaphore_mem>>) src(%149 : memref<1x16xf32, #tpu.memory_space<any>>) dst(%150 : memref<1x16xf32, #tpu.memory_space<vmem>>)
    %c10_i32_73 = arith.constant 10 : i32
    %c0_i32_74 = arith.constant 0 : i32
    %c0_i32_75 = arith.constant 0 : i32
    %153 = tpu.memref_slice %arg2[%c0_i32_74, %c0_i32_75] : memref<64x16xf32, #tpu.memory_space<any>> -> memref<1x16xf32, #tpu.memory_space<any>>
    %c0_i32_76 = arith.constant 0 : i32
    %154 = tpu.memref_slice %arg4[%c10_i32_73, %c0_i32_76] : memref<16x16xf32, #tpu.memory_space<vmem>> -> memref<1x16xf32, #tpu.memory_space<vmem>>
    %155 = tpu.memref_slice %arg5[%c10_i32_73] : memref<16x!tpu.dma_semaphore, #tpu.memory_space<semaphore_mem>> -> memref<1x!tpu.dma_semaphore, #tpu.memory_space<semaphore_mem>>
    %156 = tpu.memref_squeeze %155 : memref<1x!tpu.dma_semaphore, #tpu.memory_space<semaphore_mem>> -> memref<!tpu.dma_semaphore, #tpu.memory_space<semaphore_mem>>
    tpu.wait_dma2 semaphore(%156 : memref<!tpu.dma_semaphore, #tpu.memory_space<semaphore_mem>>) src(%153 : memref<1x16xf32, #tpu.memory_space<any>>) dst(%154 : memref<1x16xf32, #tpu.memory_space<vmem>>)
    %c11_i32_77 = arith.constant 11 : i32
    %c0_i32_78 = arith.constant 0 : i32
    %c0_i32_79 = arith.constant 0 : i32
    %157 = tpu.memref_slice %arg2[%c0_i32_78, %c0_i32_79] : memref<64x16xf32, #tpu.memory_space<any>> -> memref<1x16xf32, #tpu.memory_space<any>>
    %c0_i32_80 = arith.constant 0 : i32
    %158 = tpu.memref_slice %arg4[%c11_i32_77, %c0_i32_80] : memref<16x16xf32, #tpu.memory_space<vmem>> -> memref<1x16xf32, #tpu.memory_space<vmem>>
    %159 = tpu.memref_slice %arg5[%c11_i32_77] : memref<16x!tpu.dma_semaphore, #tpu.memory_space<semaphore_mem>> -> memref<1x!tpu.dma_semaphore, #tpu.memory_space<semaphore_mem>>
    %160 = tpu.memref_squeeze %159 : memref<1x!tpu.dma_semaphore, #tpu.memory_space<semaphore_mem>> -> memref<!tpu.dma_semaphore, #tpu.memory_space<semaphore_mem>>
    tpu.wait_dma2 semaphore(%160 : memref<!tpu.dma_semaphore, #tpu.memory_space<semaphore_mem>>) src(%157 : memref<1x16xf32, #tpu.memory_space<any>>) dst(%158 : memref<1x16xf32, #tpu.memory_space<vmem>>)
    %c12_i32_81 = arith.constant 12 : i32
    %c0_i32_82 = arith.constant 0 : i32
    %c0_i32_83 = arith.constant 0 : i32
    %161 = tpu.memref_slice %arg2[%c0_i32_82, %c0_i32_83] : memref<64x16xf32, #tpu.memory_space<any>> -> memref<1x16xf32, #tpu.memory_space<any>>
    %c0_i32_84 = arith.constant 0 : i32
    %162 = tpu.memref_slice %arg4[%c12_i32_81, %c0_i32_84] : memref<16x16xf32, #tpu.memory_space<vmem>> -> memref<1x16xf32, #tpu.memory_space<vmem>>
    %163 = tpu.memref_slice %arg5[%c12_i32_81] : memref<16x!tpu.dma_semaphore, #tpu.memory_space<semaphore_mem>> -> memref<1x!tpu.dma_semaphore, #tpu.memory_space<semaphore_mem>>
    %164 = tpu.memref_squeeze %163 : memref<1x!tpu.dma_semaphore, #tpu.memory_space<semaphore_mem>> -> memref<!tpu.dma_semaphore, #tpu.memory_space<semaphore_mem>>
    tpu.wait_dma2 semaphore(%164 : memref<!tpu.dma_semaphore, #tpu.memory_space<semaphore_mem>>) src(%161 : memref<1x16xf32, #tpu.memory_space<any>>) dst(%162 : memref<1x16xf32, #tpu.memory_space<vmem>>)
    %c13_i32_85 = arith.constant 13 : i32
    %c0_i32_86 = arith.constant 0 : i32
    %c0_i32_87 = arith.constant 0 : i32
    %165 = tpu.memref_slice %arg2[%c0_i32_86, %c0_i32_87] : memref<64x16xf32, #tpu.memory_space<any>> -> memref<1x16xf32, #tpu.memory_space<any>>
    %c0_i32_88 = arith.constant 0 : i32
    %166 = tpu.memref_slice %arg4[%c13_i32_85, %c0_i32_88] : memref<16x16xf32, #tpu.memory_space<vmem>> -> memref<1x16xf32, #tpu.memory_space<vmem>>
    %167 = tpu.memref_slice %arg5[%c13_i32_85] : memref<16x!tpu.dma_semaphore, #tpu.memory_space<semaphore_mem>> -> memref<1x!tpu.dma_semaphore, #tpu.memory_space<semaphore_mem>>
    %168 = tpu.memref_squeeze %167 : memref<1x!tpu.dma_semaphore, #tpu.memory_space<semaphore_mem>> -> memref<!tpu.dma_semaphore, #tpu.memory_space<semaphore_mem>>
    tpu.wait_dma2 semaphore(%168 : memref<!tpu.dma_semaphore, #tpu.memory_space<semaphore_mem>>) src(%165 : memref<1x16xf32, #tpu.memory_space<any>>) dst(%166 : memref<1x16xf32, #tpu.memory_space<vmem>>)
    %c14_i32_89 = arith.constant 14 : i32
    %c0_i32_90 = arith.constant 0 : i32
    %c0_i32_91 = arith.constant 0 : i32
    %169 = tpu.memref_slice %arg2[%c0_i32_90, %c0_i32_91] : memref<64x16xf32, #tpu.memory_space<any>> -> memref<1x16xf32, #tpu.memory_space<any>>
    %c0_i32_92 = arith.constant 0 : i32
    %170 = tpu.memref_slice %arg4[%c14_i32_89, %c0_i32_92] : memref<16x16xf32, #tpu.memory_space<vmem>> -> memref<1x16xf32, #tpu.memory_space<vmem>>
    %171 = tpu.memref_slice %arg5[%c14_i32_89] : memref<16x!tpu.dma_semaphore, #tpu.memory_space<semaphore_mem>> -> memref<1x!tpu.dma_semaphore, #tpu.memory_space<semaphore_mem>>
    %172 = tpu.memref_squeeze %171 : memref<1x!tpu.dma_semaphore, #tpu.memory_space<semaphore_mem>> -> memref<!tpu.dma_semaphore, #tpu.memory_space<semaphore_mem>>
    tpu.wait_dma2 semaphore(%172 : memref<!tpu.dma_semaphore, #tpu.memory_space<semaphore_mem>>) src(%169 : memref<1x16xf32, #tpu.memory_space<any>>) dst(%170 : memref<1x16xf32, #tpu.memory_space<vmem>>)
    %c15_i32_93 = arith.constant 15 : i32
    %c0_i32_94 = arith.constant 0 : i32
    %c0_i32_95 = arith.constant 0 : i32
    %173 = tpu.memref_slice %arg2[%c0_i32_94, %c0_i32_95] : memref<64x16xf32, #tpu.memory_space<any>> -> memref<1x16xf32, #tpu.memory_space<any>>
    %c0_i32_96 = arith.constant 0 : i32
    %174 = tpu.memref_slice %arg4[%c15_i32_93, %c0_i32_96] : memref<16x16xf32, #tpu.memory_space<vmem>> -> memref<1x16xf32, #tpu.memory_space<vmem>>
    %175 = tpu.memref_slice %arg5[%c15_i32_93] : memref<16x!tpu.dma_semaphore, #tpu.memory_space<semaphore_mem>> -> memref<1x!tpu.dma_semaphore, #tpu.memory_space<semaphore_mem>>
    %176 = tpu.memref_squeeze %175 : memref<1x!tpu.dma_semaphore, #tpu.memory_space<semaphore_mem>> -> memref<!tpu.dma_semaphore, #tpu.memory_space<semaphore_mem>>
    tpu.wait_dma2 semaphore(%176 : memref<!tpu.dma_semaphore, #tpu.memory_space<semaphore_mem>>) src(%173 : memref<1x16xf32, #tpu.memory_space<any>>) dst(%174 : memref<1x16xf32, #tpu.memory_space<vmem>>)
    %c16_i32_97 = arith.constant 16 : i32
    %c0 = arith.constant 0 : index
    %c0_98 = arith.constant 0 : index
    %177 = vector.load %arg4[%c0, %c0_98] : memref<16x16xf32, #tpu.memory_space<vmem>>, vector<16x16xf32>
    %c0_99 = arith.constant 0 : index
    %c0_100 = arith.constant 0 : index
    %178 = vector.load %arg3[%c0_99, %c0_100] : memref<16x16xf32, #tpu.memory_space<vmem>>, vector<16x16xf32>
    tpu.vector_store %arg3[%c0_99, %c0_100], %177 {strides = array<i32>} : memref<16x16xf32, #tpu.memory_space<vmem>>, vector<16x16xf32>,
    return
  }
  func.func @transform_1(%arg0: i32, %arg1: memref<32xi32, #tpu.memory_space<smem>>) -> (i32, i32) {
    %c0_i32 = arith.constant 0 : i32
    %c0_i32_0 = arith.constant 0 : i32
    return %arg0, %c0_i32 : i32, i32
  }
}

</mosaic_0001>

<llo_original>
// kernel: tpu_custom_call.1
$region0: #{tpu_custom_call.1}
  #allocation0 [shape = 'u32[]', space=smem, size = 0x4, offset = 0x4, fixed_abs, tag = 'smem constant byte address 0x4 - core index']
  #allocation1 [shape = 'u32[144,128]{1,0:T(1,128)}', space=vmem, size = 0x12000, scoped, tag = 'internal scratch']
  #allocation2 [shape = 'f32[16,16]{1,0:T(8,128)}', space=vmem, size = 0x2000, scoped, tag = 'scratch operand']
  #allocation3 [shape = 's32[16]{0}', space=sflag, size = 0x40, scoped, tag = 'scratch operand']
  #allocation4 [shape = 's32[1]{0}', space=sflag, size = 0x4, scoped, tag = 'scoped memory for tpu_custom_call.1']
  #allocation5 [shape = 'u8[512]{0}', space=smem, size = 0x200, scoped, tag = 'prefetched SMEM operand 0']
  #allocation6 [shape = 's32[]', space=sflag, size = 0x4, offset = 0, fixed_abs, tag = 'sflag constant byte address 0x0 - dummy sync flag']
  #allocation7 [shape = 's32[]', space=sflag, size = 0x4, offset = 0, fixed_abs, tag = 'sflag constant byte address 0x0 - dummy sync flag']
  #allocation8 [shape = 's32[]', space=sflag, size = 0x4, offset = 0, fixed_abs, tag = 'sflag constant byte address 0x0 - dummy sync flag']
  #allocation9 [shape = 's32[]', space=sflag, size = 0x4, offset = 0, fixed_abs, tag = 'sflag constant byte address 0x0 - dummy sync flag']
  #allocation10 [shape = 's32[]', space=sflag, size = 0x4, offset = 0, fixed_abs, tag = 'sflag constant byte address 0x0 - dummy sync flag']
  #allocation11 [shape = 's32[]', space=sflag, size = 0x4, offset = 0, fixed_abs, tag = 'sflag constant byte address 0x0 - dummy sync flag']
  #allocation12 [shape = 's32[]', space=sflag, size = 0x4, offset = 0, fixed_abs, tag = 'sflag constant byte address 0x0 - dummy sync flag']
  #allocation13 [shape = 's32[]', space=sflag, size = 0x4, offset = 0, fixed_abs, tag = 'sflag constant byte address 0x0 - dummy sync flag']
  #allocation14 [shape = 's32[]', space=sflag, size = 0x4, offset = 0, fixed_abs, tag = 'sflag constant byte address 0x0 - dummy sync flag']
  #allocation15 [shape = 's32[]', space=sflag, size = 0x4, offset = 0, fixed_abs, tag = 'sflag constant byte address 0x0 - dummy sync flag']
  #allocation16 [shape = 's32[]', space=sflag, size = 0x4, offset = 0, fixed_abs, tag = 'sflag constant byte address 0x0 - dummy sync flag']
  #allocation17 [shape = 's32[]', space=sflag, size = 0x4, offset = 0, fixed_abs, tag = 'sflag constant byte address 0x0 - dummy sync flag']
  #allocation18 [shape = 's32[]', space=sflag, size = 0x4, offset = 0, fixed_abs, tag = 'sflag constant byte address 0x0 - dummy sync flag']
  #allocation19 [shape = 's32[]', space=sflag, size = 0x4, offset = 0, fixed_abs, tag = 'sflag constant byte address 0x0 - dummy sync flag']
  #allocation20 [shape = 's32[]', space=sflag, size = 0x4, offset = 0, fixed_abs, tag = 'sflag constant byte address 0x0 - dummy sync flag']
  #allocation21 [shape = 's32[]', space=sflag, size = 0x4, offset = 0, fixed_abs, tag = 'sflag constant byte address 0x0 - dummy sync flag']
  %s0 = inlined_call_operand.vmem [shape: s32[32], index: 0, kind: input, shape index: {}]
  %s1 = inlined_call_operand.vmem [shape: f32[64,16], index: 1, kind: input, shape index: {}]
  %s2 = inlined_call_operand.vmem [shape: f32[32,16], index: 2, kind: output, shape index: {}]
  %s3 = sld [smem:[#allocation0]]
  $region505: #{tpu_custom_call.1} parent=0
    _
  %s5 = ssub.s32 1, %s3
  %s6 = scalar_select 0, %s5, %s3
  %s7 = sshll.u32 %s0, 4
  %s8 = int_to_ptr.vmem [resolvable:$true] %s7
  %10 = dma.vmem_to_smem %s8, 16, [#allocation5], [#allocation4]
  %11 = dma.done [#allocation4], 16
  %12 = sfence
  loop: start=0, step=1, limit=3
  $region2: #{tpu_custom_call.1} parent=0 // loop_pre_header
    _
  $region3: #{tpu_custom_call.1} parent=0 // loop_header
    %s14 = sphi 0, %s18
    %p15 = scmp.ge.s32.totalorder %s14, 3
    %s23 = sphi 0, %s25
    %s26 = sphi 0, %s23
    %s36 = sphi 0, %s26
  $region4: #{tpu_custom_call.1} parent=0 // loop_header_branch
    %17 = sbr.rel (%p15) target = $region8
  $region5: #{tpu_custom_call.1} parent=0 // loop_body
    %s19 = ssub.s32 %s14, 1
    %s20 = sadd.s32 %s14, 1
    %s21 = ssub.s32 %s14, %s20
    %p22 = scmp.eq.s32.totalorder %s21, 0
    %s24 = sadd.s32 %s23, 1
    %s25 = scalar_select %p22, %s23, %s24
    %p27 = pneg %p22
    %p28 = scmp.eq.s32.totalorder %s14, 1
    %p29 = por %p27, %p28
    %p30 = scmp.ne.s32.totalorder %s23, %s26
    %p31 = scmp.eq.s32.totalorder %s14, 0
    %p32 = por %p30, %p31
    %p33 = scmp.ne.s32.totalorder %s23, %s26
    %p34 = scmp.eq.s32.totalorder %s19, 1
    %p35 = por %p33, %p34
    %p37 = scmp.ne.s32.totalorder %s26, %s36
    %p38 = scmp.eq.s32.totalorder %s19, 0
    %p39 = por %p37, %p38
    %p40 = scmp.lt.s32.totalorder %s14, 2
    // Predicated region
    $region9: #{tpu_custom_call.1} parent=5 // pred_check
      %p41 = pneg %p40
    $region10: #{tpu_custom_call.1} parent=5 // pred_check_branch
      %43 = sbr.rel (%p41) target = $region12
    $region11: #{tpu_custom_call.1} parent=5 // pred_region
      %p44 = pneg %p32
      %p45 = pneg %p29
      %s46 = smul.u32 2, %s14
      %p47 = scmp.lt.s32.totalorder %s46, 3
      %s48 = scalar_select %p47, %s46, 3
      %s49 = smul.addr %s48, 8
      %s50 = scalar_lea.vmem %s2, %s49
      %s51 = smul.u32 2, %s14
      %p52 = scmp.lt.s32.totalorder %s51, 3
      %s53 = scalar_select %p52, %s51, 3
      %s54 = smul.addr %s53, 8
      %s55 = scalar_lea.vmem %s2, %s54
      %s56 = smul.u32 2, %s14
      %s57 = smul.u32 %s14, 16
      %s58 = sld [smem:[#allocation5 + %s57]]
      %s59 = scalar_lea.vmem %s1, %s58
      %p61 = scmp.lt.u32.totalorder 1, 8
      %p62 = pneg %p61
      // Predicated region
      $region13: #{tpu_custom_call.1} parent=11 // pred_check
        _
      $region14: #{tpu_custom_call.1} parent=11 // pred_check_branch
        %64 = sbr.rel (%p61) target = $region16
      $region15: #{tpu_custom_call.1} parent=11 // pred_region
        %s79 = sand.u32 1, 7
        %p80 = scmp.eq.s32.totalorder %s79, 0
        %p81 = pneg %p80
        // Predicated region
        $region28: #{tpu_custom_call.1} parent=15 // pred_check
          _
        $region29: #{tpu_custom_call.1} parent=15 // pred_check_branch
          %83 = sbr.rel (%p80) target = $region31
        $region30: #{tpu_custom_call.1} parent=15 // pred_region
          %s84 = sand.u32 1, 7
          %s85 = ssub.s32 1, %s84
          %s86 = scalar_lea.vmem %s59, %s85
          %s87 = ssub.s32 1, %s84
          %s88 = scalar_lea.vmem [#allocation2], %s87
          %s89 = sshllo.u32 0, %s84
          loop: start=0, step=1, limit=1
          $region32: #{tpu_custom_call.1} parent=30 // loop_pre_header
            _
          $region33: #{tpu_custom_call.1} parent=30 // loop_header
            %s91 = sphi 0, %s95
            %p92 = scmp.ge.s32.totalorder %s91, 1
            %s96 = sphi %s86, %s86
            %s97 = sphi %s88, %s88
          $region34: #{tpu_custom_call.1} parent=30 // loop_header_branch
            %94 = sbr.rel (%p92) target = $region38
          $region35: #{tpu_custom_call.1} parent=30 // loop_body
            %v98 = vld [vmem:[%s96] sm:%s89]
            %99 = vst [vmem:[%s97] sm:%s89] %v98
          $region36: #{tpu_custom_call.1} parent=30 // loop_footer
            %s95 = sadd.s32 1, %s91
          $region37: #{tpu_custom_call.1} parent=30 // loop_footer_branch
            %90 = sbr.rel target = $region33
          $region38: #{tpu_custom_call.1} parent=30 // loop_exit
            _
        $region31: #{tpu_custom_call.1} parent=15 // pred_fallthru
          _
      $region16: #{tpu_custom_call.1} parent=11 // pred_fallthru
        _
      // Predicated region
      $region17: #{tpu_custom_call.1} parent=11 // pred_check
        %p65 = pneg %p61
      $region18: #{tpu_custom_call.1} parent=11 // pred_check_branch
        %67 = sbr.rel (%p65) target = $region20
      $region19: #{tpu_custom_call.1} parent=11 // pred_region
        %s68 = sshllo.u32 0, 1
        loop: start=0, step=1, limit=1
        $region21: #{tpu_custom_call.1} parent=19 // loop_pre_header
          _
        $region22: #{tpu_custom_call.1} parent=19 // loop_header
          %s70 = sphi 0, %s74
          %p71 = scmp.ge.s32.totalorder %s70, 1
          %s75 = sphi %s59, %s59
          %s76 = sphi [#allocation2], [#allocation2]
        $region23: #{tpu_custom_call.1} parent=19 // loop_header_branch
          %73 = sbr.rel (%p71) target = $region27
        $region24: #{tpu_custom_call.1} parent=19 // loop_body
          %v77 = vld [vmem:[%s75] sm:%s68]
          %78 = vst [vmem:[%s76] sm:%s68] %v77
        $region25: #{tpu_custom_call.1} parent=19 // loop_footer
          %s74 = sadd.s32 1, %s70
        $region26: #{tpu_custom_call.1} parent=19 // loop_footer_branch
          %69 = sbr.rel target = $region22
        $region27: #{tpu_custom_call.1} parent=19 // loop_exit
          _
      $region20: #{tpu_custom_call.1} parent=11 // pred_fallthru
        _
      // Predicated region
      $region39: #{tpu_custom_call.1} parent=11 // pred_check
        _
      $region40: #{tpu_custom_call.1} parent=11 // pred_check_branch
        %102 = sbr.rel (0) target = $region42
      $region41: #{tpu_custom_call.1} parent=11 // pred_region
        %103 = vsyncadd [#allocation3], 16
      $region42: #{tpu_custom_call.1} parent=11 // pred_fallthru
        _
      %s104 = sadd.s32 %s57, 1
      %s105 = sld [smem:[#allocation5 + %s104]]
      %s106 = scalar_lea.vmem %s1, %s105
      %s107 = scalar_lea.vmem [#allocation2], 1
      %s108 = scalar_lea.sflag [#allocation3], 1
      %p110 = scmp.lt.u32.totalorder 1, 8
      %p111 = pneg %p110
      // Predicated region
      $region43: #{tpu_custom_call.1} parent=11 // pred_check
        _
      $region44: #{tpu_custom_call.1} parent=11 // pred_check_branch
        %113 = sbr.rel (%p110) target = $region46
      $region45: #{tpu_custom_call.1} parent=11 // pred_region
        %s128 = sand.u32 1, 7
        %p129 = scmp.eq.s32.totalorder %s128, 0
        %p130 = pneg %p129
        // Predicated region
        $region58: #{tpu_custom_call.1} parent=45 // pred_check
          _
        $region59: #{tpu_custom_call.1} parent=45 // pred_check_branch
          %132 = sbr.rel (%p129) target = $region61
        $region60: #{tpu_custom_call.1} parent=45 // pred_region
          %s133 = sand.u32 1, 7
          %s134 = ssub.s32 1, %s133
          %s135 = scalar_lea.vmem %s106, %s134
          %s136 = ssub.s32 1, %s133
          %s137 = scalar_lea.vmem %s107, %s136 [#allocation2]
          %s138 = sshllo.u32 0, %s133
          loop: start=0, step=1, limit=1
          $region62: #{tpu_custom_call.1} parent=60 // loop_pre_header
            _
          $region63: #{tpu_custom_call.1} parent=60 // loop_header
            %s140 = sphi 0, %s144
            %p141 = scmp.ge.s32.totalorder %s140, 1
            %s145 = sphi %s135, %s135
            %s146 = sphi %s137, %s137
          $region64: #{tpu_custom_call.1} parent=60 // loop_header_branch
            %143 = sbr.rel (%p141) target = $region68
          $region65: #{tpu_custom_call.1} parent=60 // loop_body
            %v147 = vld [vmem:[%s145] sm:%s138]
            %148 = vst [vmem:[%s146] sm:%s138] %v147
          $region66: #{tpu_custom_call.1} parent=60 // loop_footer
            %s144 = sadd.s32 1, %s140
          $region67: #{tpu_custom_call.1} parent=60 // loop_footer_branch
            %139 = sbr.rel target = $region63
          $region68: #{tpu_custom_call.1} parent=60 // loop_exit
            _
        $region61: #{tpu_custom_call.1} parent=45 // pred_fallthru
          _
      $region46: #{tpu_custom_call.1} parent=11 // pred_fallthru
        _
      // Predicated region
      $region47: #{tpu_custom_call.1} parent=11 // pred_check
        %p114 = pneg %p110
      $region48: #{tpu_custom_call.1} parent=11 // pred_check_branch
        %116 = sbr.rel (%p114) target = $region50
      $region49: #{tpu_custom_call.1} parent=11 // pred_region
        %s117 = sshllo.u32 0, 1
        loop: start=0, step=1, limit=1
        $region51: #{tpu_custom_call.1} parent=49 // loop_pre_header
          _
        $region52: #{tpu_custom_call.1} parent=49 // loop_header
          %s119 = sphi 0, %s123
          %p120 = scmp.ge.s32.totalorder %s119, 1
          %s124 = sphi %s106, %s106
          %s125 = sphi %s107, %s107
        $region53: #{tpu_custom_call.1} parent=49 // loop_header_branch
          %122 = sbr.rel (%p120) target = $region57
        $region54: #{tpu_custom_call.1} parent=49 // loop_body
          %v126 = vld [vmem:[%s124] sm:%s117]
          %127 = vst [vmem:[%s125] sm:%s117] %v126
        $region55: #{tpu_custom_call.1} parent=49 // loop_footer
          %s123 = sadd.s32 1, %s119
        $region56: #{tpu_custom_call.1} parent=49 // loop_footer_branch
          %118 = sbr.rel target = $region52
        $region57: #{tpu_custom_call.1} parent=49 // loop_exit
          _
      $region50: #{tpu_custom_call.1} parent=11 // pred_fallthru
        _
      // Predicated region
      $region69: #{tpu_custom_call.1} parent=11 // pred_check
        _
      $region70: #{tpu_custom_call.1} parent=11 // pred_check_branch
        %151 = sbr.rel (0) target = $region72
      $region71: #{tpu_custom_call.1} parent=11 // pred_region
        %152 = vsyncadd %s108, 16
      $region72: #{tpu_custom_call.1} parent=11 // pred_fallthru
        _
      %s153 = sadd.s32 %s57, 2
      %s154 = sld [smem:[#allocation5 + %s153]]
      %s155 = scalar_lea.vmem %s1, %s154
      %s156 = scalar_lea.vmem [#allocation2], 2
      %s157 = scalar_lea.sflag [#allocation3], 2
      %p159 = scmp.lt.u32.totalorder 1, 8
      %p160 = pneg %p159
      // Predicated region
      $region73: #{tpu_custom_call.1} parent=11 // pred_check
        _
      $region74: #{tpu_custom_call.1} parent=11 // pred_check_branch
        %162 = sbr.rel (%p159) target = $region76
      $region75: #{tpu_custom_call.1} parent=11 // pred_region
        %s177 = sand.u32 1, 7
        %p178 = scmp.eq.s32.totalorder %s177, 0
        %p179 = pneg %p178
        // Predicated region
        $region88: #{tpu_custom_call.1} parent=75 // pred_check
          _
        $region89: #{tpu_custom_call.1} parent=75 // pred_check_branch
          %181 = sbr.rel (%p178) target = $region91
        $region90: #{tpu_custom_call.1} parent=75 // pred_region
          %s182 = sand.u32 1, 7
          %s183 = ssub.s32 1, %s182
          %s184 = scalar_lea.vmem %s155, %s183
          %s185 = ssub.s32 1, %s182
          %s186 = scalar_lea.vmem %s156, %s185 [#allocation2]
          %s187 = sshllo.u32 0, %s182
          loop: start=0, step=1, limit=1
          $region92: #{tpu_custom_call.1} parent=90 // loop_pre_header
            _
          $region93: #{tpu_custom_call.1} parent=90 // loop_header
            %s189 = sphi 0, %s193
            %p190 = scmp.ge.s32.totalorder %s189, 1
            %s194 = sphi %s184, %s184
            %s195 = sphi %s186, %s186
          $region94: #{tpu_custom_call.1} parent=90 // loop_header_branch
            %192 = sbr.rel (%p190) target = $region98
          $region95: #{tpu_custom_call.1} parent=90 // loop_body
            %v196 = vld [vmem:[%s194] sm:%s187]
            %197 = vst [vmem:[%s195] sm:%s187] %v196
          $region96: #{tpu_custom_call.1} parent=90 // loop_footer
            %s193 = sadd.s32 1, %s189
          $region97: #{tpu_custom_call.1} parent=90 // loop_footer_branch
            %188 = sbr.rel target = $region93
          $region98: #{tpu_custom_call.1} parent=90 // loop_exit
            _
        $region91: #{tpu_custom_call.1} parent=75 // pred_fallthru
          _
      $region76: #{tpu_custom_call.1} parent=11 // pred_fallthru
        _
      // Predicated region
      $region77: #{tpu_custom_call.1} parent=11 // pred_check
        %p163 = pneg %p159
      $region78: #{tpu_custom_call.1} parent=11 // pred_check_branch
        %165 = sbr.rel (%p163) target = $region80
      $region79: #{tpu_custom_call.1} parent=11 // pred_region
        %s166 = sshllo.u32 0, 1
        loop: start=0, step=1, limit=1
        $region81: #{tpu_custom_call.1} parent=79 // loop_pre_header
          _
        $region82: #{tpu_custom_call.1} parent=79 // loop_header
          %s168 = sphi 0, %s172
          %p169 = scmp.ge.s32.totalorder %s168, 1
          %s173 = sphi %s155, %s155
          %s174 = sphi %s156, %s156
        $region83: #{tpu_custom_call.1} parent=79 // loop_header_branch
          %171 = sbr.rel (%p169) target = $region87
        $region84: #{tpu_custom_call.1} parent=79 // loop_body
          %v175 = vld [vmem:[%s173] sm:%s166]
          %176 = vst [vmem:[%s174] sm:%s166] %v175
        $region85: #{tpu_custom_call.1} parent=79 // loop_footer
          %s172 = sadd.s32 1, %s168
        $region86: #{tpu_custom_call.1} parent=79 // loop_footer_branch
          %167 = sbr.rel target = $region82
        $region87: #{tpu_custom_call.1} parent=79 // loop_exit
          _
      $region80: #{tpu_custom_call.1} parent=11 // pred_fallthru
        _
      // Predicated region
      $region99: #{tpu_custom_call.1} parent=11 // pred_check
        _
      $region100: #{tpu_custom_call.1} parent=11 // pred_check_branch
        %200 = sbr.rel (0) target = $region102
      $region101: #{tpu_custom_call.1} parent=11 // pred_region
        %201 = vsyncadd %s157, 16
      $region102: #{tpu_custom_call.1} parent=11 // pred_fallthru
        _
      %s202 = sadd.s32 %s57, 3
      %s203 = sld [smem:[#allocation5 + %s202]]
      %s204 = scalar_lea.vmem %s1, %s203
      %s205 = scalar_lea.vmem [#allocation2], 3
      %s206 = scalar_lea.sflag [#allocation3], 3
      %p208 = scmp.lt.u32.totalorder 1, 8
      %p209 = pneg %p208
      // Predicated region
      $region103: #{tpu_custom_call.1} parent=11 // pred_check
        _
      $region104: #{tpu_custom_call.1} parent=11 // pred_check_branch
        %211 = sbr.rel (%p208) target = $region106
      $region105: #{tpu_custom_call.1} parent=11 // pred_region
        %s226 = sand.u32 1, 7
        %p227 = scmp.eq.s32.totalorder %s226, 0
        %p228 = pneg %p227
        // Predicated region
        $region118: #{tpu_custom_call.1} parent=105 // pred_check
          _
        $region119: #{tpu_custom_call.1} parent=105 // pred_check_branch
          %230 = sbr.rel (%p227) target = $region121
        $region120: #{tpu_custom_call.1} parent=105 // pred_region
          %s231 = sand.u32 1, 7
          %s232 = ssub.s32 1, %s231
          %s233 = scalar_lea.vmem %s204, %s232
          %s234 = ssub.s32 1, %s231
          %s235 = scalar_lea.vmem %s205, %s234 [#allocation2]
          %s236 = sshllo.u32 0, %s231
          loop: start=0, step=1, limit=1
          $region122: #{tpu_custom_call.1} parent=120 // loop_pre_header
            _
          $region123: #{tpu_custom_call.1} parent=120 // loop_header
            %s238 = sphi 0, %s242
            %p239 = scmp.ge.s32.totalorder %s238, 1
            %s243 = sphi %s233, %s233
            %s244 = sphi %s235, %s235
          $region124: #{tpu_custom_call.1} parent=120 // loop_header_branch
            %241 = sbr.rel (%p239) target = $region128
          $region125: #{tpu_custom_call.1} parent=120 // loop_body
            %v245 = vld [vmem:[%s243] sm:%s236]
            %246 = vst [vmem:[%s244] sm:%s236] %v245
          $region126: #{tpu_custom_call.1} parent=120 // loop_footer
            %s242 = sadd.s32 1, %s238
          $region127: #{tpu_custom_call.1} parent=120 // loop_footer_branch
            %237 = sbr.rel target = $region123
          $region128: #{tpu_custom_call.1} parent=120 // loop_exit
            _
        $region121: #{tpu_custom_call.1} parent=105 // pred_fallthru
          _
      $region106: #{tpu_custom_call.1} parent=11 // pred_fallthru
        _
      // Predicated region
      $region107: #{tpu_custom_call.1} parent=11 // pred_check
        %p212 = pneg %p208
      $region108: #{tpu_custom_call.1} parent=11 // pred_check_branch
        %214 = sbr.rel (%p212) target = $region110
      $region109: #{tpu_custom_call.1} parent=11 // pred_region
        %s215 = sshllo.u32 0, 1
        loop: start=0, step=1, limit=1
        $region111: #{tpu_custom_call.1} parent=109 // loop_pre_header
          _
        $region112: #{tpu_custom_call.1} parent=109 // loop_header
          %s217 = sphi 0, %s221
          %p218 = scmp.ge.s32.totalorder %s217, 1
          %s222 = sphi %s204, %s204
          %s223 = sphi %s205, %s205
        $region113: #{tpu_custom_call.1} parent=109 // loop_header_branch
          %220 = sbr.rel (%p218) target = $region117
        $region114: #{tpu_custom_call.1} parent=109 // loop_body
          %v224 = vld [vmem:[%s222] sm:%s215]
          %225 = vst [vmem:[%s223] sm:%s215] %v224
        $region115: #{tpu_custom_call.1} parent=109 // loop_footer
          %s221 = sadd.s32 1, %s217
        $region116: #{tpu_custom_call.1} parent=109 // loop_footer_branch
          %216 = sbr.rel target = $region112
        $region117: #{tpu_custom_call.1} parent=109 // loop_exit
          _
      $region110: #{tpu_custom_call.1} parent=11 // pred_fallthru
        _
      // Predicated region
      $region129: #{tpu_custom_call.1} parent=11 // pred_check
        _
      $region130: #{tpu_custom_call.1} parent=11 // pred_check_branch
        %249 = sbr.rel (0) target = $region132
      $region131: #{tpu_custom_call.1} parent=11 // pred_region
        %250 = vsyncadd %s206, 16
      $region132: #{tpu_custom_call.1} parent=11 // pred_fallthru
        _
      %s251 = sadd.s32 %s57, 4
      %s252 = sld [smem:[#allocation5 + %s251]]
      %s253 = scalar_lea.vmem %s1, %s252
      %s254 = scalar_lea.vmem [#allocation2], 4
      %s255 = scalar_lea.sflag [#allocation3], 4
      %p257 = scmp.lt.u32.totalorder 1, 8
      %p258 = pneg %p257
      // Predicated region
      $region133: #{tpu_custom_call.1} parent=11 // pred_check
        _
      $region134: #{tpu_custom_call.1} parent=11 // pred_check_branch
        %260 = sbr.rel (%p257) target = $region136
      $region135: #{tpu_custom_call.1} parent=11 // pred_region
        %s275 = sand.u32 1, 7
        %p276 = scmp.eq.s32.totalorder %s275, 0
        %p277 = pneg %p276
        // Predicated region
        $region148: #{tpu_custom_call.1} parent=135 // pred_check
          _
        $region149: #{tpu_custom_call.1} parent=135 // pred_check_branch
          %279 = sbr.rel (%p276) target = $region151
        $region150: #{tpu_custom_call.1} parent=135 // pred_region
          %s280 = sand.u32 1, 7
          %s281 = ssub.s32 1, %s280
          %s282 = scalar_lea.vmem %s253, %s281
          %s283 = ssub.s32 1, %s280
          %s284 = scalar_lea.vmem %s254, %s283 [#allocation2]
          %s285 = sshllo.u32 0, %s280
          loop: start=0, step=1, limit=1
          $region152: #{tpu_custom_call.1} parent=150 // loop_pre_header
            _
          $region153: #{tpu_custom_call.1} parent=150 // loop_header
            %s287 = sphi 0, %s291
            %p288 = scmp.ge.s32.totalorder %s287, 1
            %s292 = sphi %s282, %s282
            %s293 = sphi %s284, %s284
          $region154: #{tpu_custom_call.1} parent=150 // loop_header_branch
            %290 = sbr.rel (%p288) target = $region158
          $region155: #{tpu_custom_call.1} parent=150 // loop_body
            %v294 = vld [vmem:[%s292] sm:%s285]
            %295 = vst [vmem:[%s293] sm:%s285] %v294
          $region156: #{tpu_custom_call.1} parent=150 // loop_footer
            %s291 = sadd.s32 1, %s287
          $region157: #{tpu_custom_call.1} parent=150 // loop_footer_branch
            %286 = sbr.rel target = $region153
          $region158: #{tpu_custom_call.1} parent=150 // loop_exit
            _
        $region151: #{tpu_custom_call.1} parent=135 // pred_fallthru
          _
      $region136: #{tpu_custom_call.1} parent=11 // pred_fallthru
        _
      // Predicated region
      $region137: #{tpu_custom_call.1} parent=11 // pred_check
        %p261 = pneg %p257
      $region138: #{tpu_custom_call.1} parent=11 // pred_check_branch
        %263 = sbr.rel (%p261) target = $region140
      $region139: #{tpu_custom_call.1} parent=11 // pred_region
        %s264 = sshllo.u32 0, 1
        loop: start=0, step=1, limit=1
        $region141: #{tpu_custom_call.1} parent=139 // loop_pre_header
          _
        $region142: #{tpu_custom_call.1} parent=139 // loop_header
          %s266 = sphi 0, %s270
          %p267 = scmp.ge.s32.totalorder %s266, 1
          %s271 = sphi %s253, %s253
          %s272 = sphi %s254, %s254
        $region143: #{tpu_custom_call.1} parent=139 // loop_header_branch
          %269 = sbr.rel (%p267) target = $region147
        $region144: #{tpu_custom_call.1} parent=139 // loop_body
          %v273 = vld [vmem:[%s271] sm:%s264]
          %274 = vst [vmem:[%s272] sm:%s264] %v273
        $region145: #{tpu_custom_call.1} parent=139 // loop_footer
          %s270 = sadd.s32 1, %s266
        $region146: #{tpu_custom_call.1} parent=139 // loop_footer_branch
          %265 = sbr.rel target = $region142
        $region147: #{tpu_custom_call.1} parent=139 // loop_exit
          _
      $region140: #{tpu_custom_call.1} parent=11 // pred_fallthru
        _
      // Predicated region
      $region159: #{tpu_custom_call.1} parent=11 // pred_check
        _
      $region160: #{tpu_custom_call.1} parent=11 // pred_check_branch
        %298 = sbr.rel (0) target = $region162
      $region161: #{tpu_custom_call.1} parent=11 // pred_region
        %299 = vsyncadd %s255, 16
      $region162: #{tpu_custom_call.1} parent=11 // pred_fallthru
        _
      %s300 = sadd.s32 %s57, 5
      %s301 = sld [smem:[#allocation5 + %s300]]
      %s302 = scalar_lea.vmem %s1, %s301
      %s303 = scalar_lea.vmem [#allocation2], 5
      %s304 = scalar_lea.sflag [#allocation3], 5
      %p306 = scmp.lt.u32.totalorder 1, 8
      %p307 = pneg %p306
      // Predicated region
      $region163: #{tpu_custom_call.1} parent=11 // pred_check
        _
      $region164: #{tpu_custom_call.1} parent=11 // pred_check_branch
        %309 = sbr.rel (%p306) target = $region166
      $region165: #{tpu_custom_call.1} parent=11 // pred_region
        %s324 = sand.u32 1, 7
        %p325 = scmp.eq.s32.totalorder %s324, 0
        %p326 = pneg %p325
        // Predicated region
        $region178: #{tpu_custom_call.1} parent=165 // pred_check
          _
        $region179: #{tpu_custom_call.1} parent=165 // pred_check_branch
          %328 = sbr.rel (%p325) target = $region181
        $region180: #{tpu_custom_call.1} parent=165 // pred_region
          %s329 = sand.u32 1, 7
          %s330 = ssub.s32 1, %s329
          %s331 = scalar_lea.vmem %s302, %s330
          %s332 = ssub.s32 1, %s329
          %s333 = scalar_lea.vmem %s303, %s332 [#allocation2]
          %s334 = sshllo.u32 0, %s329
          loop: start=0, step=1, limit=1
          $region182: #{tpu_custom_call.1} parent=180 // loop_pre_header
            _
          $region183: #{tpu_custom_call.1} parent=180 // loop_header
            %s336 = sphi 0, %s340
            %p337 = scmp.ge.s32.totalorder %s336, 1
            %s341 = sphi %s331, %s331
            %s342 = sphi %s333, %s333
          $region184: #{tpu_custom_call.1} parent=180 // loop_header_branch
            %339 = sbr.rel (%p337) target = $region188
          $region185: #{tpu_custom_call.1} parent=180 // loop_body
            %v343 = vld [vmem:[%s341] sm:%s334]
            %344 = vst [vmem:[%s342] sm:%s334] %v343
          $region186: #{tpu_custom_call.1} parent=180 // loop_footer
            %s340 = sadd.s32 1, %s336
          $region187: #{tpu_custom_call.1} parent=180 // loop_footer_branch
            %335 = sbr.rel target = $region183
          $region188: #{tpu_custom_call.1} parent=180 // loop_exit
            _
        $region181: #{tpu_custom_call.1} parent=165 // pred_fallthru
          _
      $region166: #{tpu_custom_call.1} parent=11 // pred_fallthru
        _
      // Predicated region
      $region167: #{tpu_custom_call.1} parent=11 // pred_check
        %p310 = pneg %p306
      $region168: #{tpu_custom_call.1} parent=11 // pred_check_branch
        %312 = sbr.rel (%p310) target = $region170
      $region169: #{tpu_custom_call.1} parent=11 // pred_region
        %s313 = sshllo.u32 0, 1
        loop: start=0, step=1, limit=1
        $region171: #{tpu_custom_call.1} parent=169 // loop_pre_header
          _
        $region172: #{tpu_custom_call.1} parent=169 // loop_header
          %s315 = sphi 0, %s319
          %p316 = scmp.ge.s32.totalorder %s315, 1
          %s320 = sphi %s302, %s302
          %s321 = sphi %s303, %s303
        $region173: #{tpu_custom_call.1} parent=169 // loop_header_branch
          %318 = sbr.rel (%p316) target = $region177
        $region174: #{tpu_custom_call.1} parent=169 // loop_body
          %v322 = vld [vmem:[%s320] sm:%s313]
          %323 = vst [vmem:[%s321] sm:%s313] %v322
        $region175: #{tpu_custom_call.1} parent=169 // loop_footer
          %s319 = sadd.s32 1, %s315
        $region176: #{tpu_custom_call.1} parent=169 // loop_footer_branch
          %314 = sbr.rel target = $region172
        $region177: #{tpu_custom_call.1} parent=169 // loop_exit
          _
      $region170: #{tpu_custom_call.1} parent=11 // pred_fallthru
        _
      // Predicated region
      $region189: #{tpu_custom_call.1} parent=11 // pred_check
        _
      $region190: #{tpu_custom_call.1} parent=11 // pred_check_branch
        %347 = sbr.rel (0) target = $region192
      $region191: #{tpu_custom_call.1} parent=11 // pred_region
        %348 = vsyncadd %s304, 16
      $region192: #{tpu_custom_call.1} parent=11 // pred_fallthru
        _
      %s349 = sadd.s32 %s57, 6
      %s350 = sld [smem:[#allocation5 + %s349]]
      %s351 = scalar_lea.vmem %s1, %s350
      %s352 = scalar_lea.vmem [#allocation2], 6
      %s353 = scalar_lea.sflag [#allocation3], 6
      %p355 = scmp.lt.u32.totalorder 1, 8
      %p356 = pneg %p355
      // Predicated region
      $region193: #{tpu_custom_call.1} parent=11 // pred_check
        _
      $region194: #{tpu_custom_call.1} parent=11 // pred_check_branch
        %358 = sbr.rel (%p355) target = $region196
      $region195: #{tpu_custom_call.1} parent=11 // pred_region
        %s373 = sand.u32 1, 7
        %p374 = scmp.eq.s32.totalorder %s373, 0
        %p375 = pneg %p374
        // Predicated region
        $region208: #{tpu_custom_call.1} parent=195 // pred_check
          _
        $region209: #{tpu_custom_call.1} parent=195 // pred_check_branch
          %377 = sbr.rel (%p374) target = $region211
        $region210: #{tpu_custom_call.1} parent=195 // pred_region
          %s378 = sand.u32 1, 7
          %s379 = ssub.s32 1, %s378
          %s380 = scalar_lea.vmem %s351, %s379
          %s381 = ssub.s32 1, %s378
          %s382 = scalar_lea.vmem %s352, %s381 [#allocation2]
          %s383 = sshllo.u32 0, %s378
          loop: start=0, step=1, limit=1
          $region212: #{tpu_custom_call.1} parent=210 // loop_pre_header
            _
          $region213: #{tpu_custom_call.1} parent=210 // loop_header
            %s385 = sphi 0, %s389
            %p386 = scmp.ge.s32.totalorder %s385, 1
            %s390 = sphi %s380, %s380
            %s391 = sphi %s382, %s382
          $region214: #{tpu_custom_call.1} parent=210 // loop_header_branch
            %388 = sbr.rel (%p386) target = $region218
          $region215: #{tpu_custom_call.1} parent=210 // loop_body
            %v392 = vld [vmem:[%s390] sm:%s383]
            %393 = vst [vmem:[%s391] sm:%s383] %v392
          $region216: #{tpu_custom_call.1} parent=210 // loop_footer
            %s389 = sadd.s32 1, %s385
          $region217: #{tpu_custom_call.1} parent=210 // loop_footer_branch
            %384 = sbr.rel target = $region213
          $region218: #{tpu_custom_call.1} parent=210 // loop_exit
            _
        $region211: #{tpu_custom_call.1} parent=195 // pred_fallthru
          _
      $region196: #{tpu_custom_call.1} parent=11 // pred_fallthru
        _
      // Predicated region
      $region197: #{tpu_custom_call.1} parent=11 // pred_check
        %p359 = pneg %p355
      $region198: #{tpu_custom_call.1} parent=11 // pred_check_branch
        %361 = sbr.rel (%p359) target = $region200
      $region199: #{tpu_custom_call.1} parent=11 // pred_region
        %s362 = sshllo.u32 0, 1
        loop: start=0, step=1, limit=1
        $region201: #{tpu_custom_call.1} parent=199 // loop_pre_header
          _
        $region202: #{tpu_custom_call.1} parent=199 // loop_header
          %s364 = sphi 0, %s368
          %p365 = scmp.ge.s32.totalorder %s364, 1
          %s369 = sphi %s351, %s351
          %s370 = sphi %s352, %s352
        $region203: #{tpu_custom_call.1} parent=199 // loop_header_branch
          %367 = sbr.rel (%p365) target = $region207
        $region204: #{tpu_custom_call.1} parent=199 // loop_body
          %v371 = vld [vmem:[%s369] sm:%s362]
          %372 = vst [vmem:[%s370] sm:%s362] %v371
        $region205: #{tpu_custom_call.1} parent=199 // loop_footer
          %s368 = sadd.s32 1, %s364
        $region206: #{tpu_custom_call.1} parent=199 // loop_footer_branch
          %363 = sbr.rel target = $region202
        $region207: #{tpu_custom_call.1} parent=199 // loop_exit
          _
      $region200: #{tpu_custom_call.1} parent=11 // pred_fallthru
        _
      // Predicated region
      $region219: #{tpu_custom_call.1} parent=11 // pred_check
        _
      $region220: #{tpu_custom_call.1} parent=11 // pred_check_branch
        %396 = sbr.rel (0) target = $region222
      $region221: #{tpu_custom_call.1} parent=11 // pred_region
        %397 = vsyncadd %s353, 16
      $region222: #{tpu_custom_call.1} parent=11 // pred_fallthru
        _
      %s398 = sadd.s32 %s57, 7
      %s399 = sld [smem:[#allocation5 + %s398]]
      %s400 = scalar_lea.vmem %s1, %s399
      %s401 = scalar_lea.vmem [#allocation2], 7
      %s402 = scalar_lea.sflag [#allocation3], 7
      %p404 = scmp.lt.u32.totalorder 1, 8
      %p405 = pneg %p404
      // Predicated region
      $region223: #{tpu_custom_call.1} parent=11 // pred_check
        _
      $region224: #{tpu_custom_call.1} parent=11 // pred_check_branch
        %407 = sbr.rel (%p404) target = $region226
      $region225: #{tpu_custom_call.1} parent=11 // pred_region
        %s422 = sand.u32 1, 7
        %p423 = scmp.eq.s32.totalorder %s422, 0
        %p424 = pneg %p423
        // Predicated region
        $region238: #{tpu_custom_call.1} parent=225 // pred_check
          _
        $region239: #{tpu_custom_call.1} parent=225 // pred_check_branch
          %426 = sbr.rel (%p423) target = $region241
        $region240: #{tpu_custom_call.1} parent=225 // pred_region
          %s427 = sand.u32 1, 7
          %s428 = ssub.s32 1, %s427
          %s429 = scalar_lea.vmem %s400, %s428
          %s430 = ssub.s32 1, %s427
          %s431 = scalar_lea.vmem %s401, %s430 [#allocation2]
          %s432 = sshllo.u32 0, %s427
          loop: start=0, step=1, limit=1
          $region242: #{tpu_custom_call.1} parent=240 // loop_pre_header
            _
          $region243: #{tpu_custom_call.1} parent=240 // loop_header
            %s434 = sphi 0, %s438
            %p435 = scmp.ge.s32.totalorder %s434, 1
            %s439 = sphi %s429, %s429
            %s440 = sphi %s431, %s431
          $region244: #{tpu_custom_call.1} parent=240 // loop_header_branch
            %437 = sbr.rel (%p435) target = $region248
          $region245: #{tpu_custom_call.1} parent=240 // loop_body
            %v441 = vld [vmem:[%s439] sm:%s432]
            %442 = vst [vmem:[%s440] sm:%s432] %v441
          $region246: #{tpu_custom_call.1} parent=240 // loop_footer
            %s438 = sadd.s32 1, %s434
          $region247: #{tpu_custom_call.1} parent=240 // loop_footer_branch
            %433 = sbr.rel target = $region243
          $region248: #{tpu_custom_call.1} parent=240 // loop_exit
            _
        $region241: #{tpu_custom_call.1} parent=225 // pred_fallthru
          _
      $region226: #{tpu_custom_call.1} parent=11 // pred_fallthru
        _
      // Predicated region
      $region227: #{tpu_custom_call.1} parent=11 // pred_check
        %p408 = pneg %p404
      $region228: #{tpu_custom_call.1} parent=11 // pred_check_branch
        %410 = sbr.rel (%p408) target = $region230
      $region229: #{tpu_custom_call.1} parent=11 // pred_region
        %s411 = sshllo.u32 0, 1
        loop: start=0, step=1, limit=1
        $region231: #{tpu_custom_call.1} parent=229 // loop_pre_header
          _
        $region232: #{tpu_custom_call.1} parent=229 // loop_header
          %s413 = sphi 0, %s417
          %p414 = scmp.ge.s32.totalorder %s413, 1
          %s418 = sphi %s400, %s400
          %s419 = sphi %s401, %s401
        $region233: #{tpu_custom_call.1} parent=229 // loop_header_branch
          %416 = sbr.rel (%p414) target = $region237
        $region234: #{tpu_custom_call.1} parent=229 // loop_body
          %v420 = vld [vmem:[%s418] sm:%s411]
          %421 = vst [vmem:[%s419] sm:%s411] %v420
        $region235: #{tpu_custom_call.1} parent=229 // loop_footer
          %s417 = sadd.s32 1, %s413
        $region236: #{tpu_custom_call.1} parent=229 // loop_footer_branch
          %412 = sbr.rel target = $region232
        $region237: #{tpu_custom_call.1} parent=229 // loop_exit
          _
      $region230: #{tpu_custom_call.1} parent=11 // pred_fallthru
        _
      // Predicated region
      $region249: #{tpu_custom_call.1} parent=11 // pred_check
        _
      $region250: #{tpu_custom_call.1} parent=11 // pred_check_branch
        %445 = sbr.rel (0) target = $region252
      $region251: #{tpu_custom_call.1} parent=11 // pred_region
        %446 = vsyncadd %s402, 16
      $region252: #{tpu_custom_call.1} parent=11 // pred_fallthru
        _
      %s447 = sadd.s32 %s57, 8
      %s448 = sld [smem:[#allocation5 + %s447]]
      %s449 = scalar_lea.vmem %s1, %s448
      %s450 = scalar_lea.vmem [#allocation2], 8
      %s451 = scalar_lea.sflag [#allocation3], 8
      %p453 = scmp.lt.u32.totalorder 1, 8
      %p454 = pneg %p453
      // Predicated region
      $region253: #{tpu_custom_call.1} parent=11 // pred_check
        _
      $region254: #{tpu_custom_call.1} parent=11 // pred_check_branch
        %456 = sbr.rel (%p453) target = $region256
      $region255: #{tpu_custom_call.1} parent=11 // pred_region
        %s471 = sand.u32 1, 7
        %p472 = scmp.eq.s32.totalorder %s471, 0
        %p473 = pneg %p472
        // Predicated region
        $region268: #{tpu_custom_call.1} parent=255 // pred_check
          _
        $region269: #{tpu_custom_call.1} parent=255 // pred_check_branch
          %475 = sbr.rel (%p472) target = $region271
        $region270: #{tpu_custom_call.1} parent=255 // pred_region
          %s476 = sand.u32 1, 7
          %s477 = ssub.s32 1, %s476
          %s478 = scalar_lea.vmem %s449, %s477
          %s479 = ssub.s32 1, %s476
          %s480 = scalar_lea.vmem %s450, %s479 [#allocation2]
          %s481 = sshllo.u32 0, %s476
          loop: start=0, step=1, limit=1
          $region272: #{tpu_custom_call.1} parent=270 // loop_pre_header
            _
          $region273: #{tpu_custom_call.1} parent=270 // loop_header
            %s483 = sphi 0, %s487
            %p484 = scmp.ge.s32.totalorder %s483, 1
            %s488 = sphi %s478, %s478
            %s489 = sphi %s480, %s480
          $region274: #{tpu_custom_call.1} parent=270 // loop_header_branch
            %486 = sbr.rel (%p484) target = $region278
          $region275: #{tpu_custom_call.1} parent=270 // loop_body
            %v490 = vld [vmem:[%s488] sm:%s481]
            %491 = vst [vmem:[%s489] sm:%s481] %v490
          $region276: #{tpu_custom_call.1} parent=270 // loop_footer
            %s487 = sadd.s32 1, %s483
          $region277: #{tpu_custom_call.1} parent=270 // loop_footer_branch
            %482 = sbr.rel target = $region273
          $region278: #{tpu_custom_call.1} parent=270 // loop_exit
            _
        $region271: #{tpu_custom_call.1} parent=255 // pred_fallthru
          _
      $region256: #{tpu_custom_call.1} parent=11 // pred_fallthru
        _
      // Predicated region
      $region257: #{tpu_custom_call.1} parent=11 // pred_check
        %p457 = pneg %p453
      $region258: #{tpu_custom_call.1} parent=11 // pred_check_branch
        %459 = sbr.rel (%p457) target = $region260
      $region259: #{tpu_custom_call.1} parent=11 // pred_region
        %s460 = sshllo.u32 0, 1
        loop: start=0, step=1, limit=1
        $region261: #{tpu_custom_call.1} parent=259 // loop_pre_header
          _
        $region262: #{tpu_custom_call.1} parent=259 // loop_header
          %s462 = sphi 0, %s466
          %p463 = scmp.ge.s32.totalorder %s462, 1
          %s467 = sphi %s449, %s449
          %s468 = sphi %s450, %s450
        $region263: #{tpu_custom_call.1} parent=259 // loop_header_branch
          %465 = sbr.rel (%p463) target = $region267
        $region264: #{tpu_custom_call.1} parent=259 // loop_body
          %v469 = vld [vmem:[%s467] sm:%s460]
          %470 = vst [vmem:[%s468] sm:%s460] %v469
        $region265: #{tpu_custom_call.1} parent=259 // loop_footer
          %s466 = sadd.s32 1, %s462
        $region266: #{tpu_custom_call.1} parent=259 // loop_footer_branch
          %461 = sbr.rel target = $region262
        $region267: #{tpu_custom_call.1} parent=259 // loop_exit
          _
      $region260: #{tpu_custom_call.1} parent=11 // pred_fallthru
        _
      // Predicated region
      $region279: #{tpu_custom_call.1} parent=11 // pred_check
        _
      $region280: #{tpu_custom_call.1} parent=11 // pred_check_branch
        %494 = sbr.rel (0) target = $region282
      $region281: #{tpu_custom_call.1} parent=11 // pred_region
        %495 = vsyncadd %s451, 16
      $region282: #{tpu_custom_call.1} parent=11 // pred_fallthru
        _
      %s496 = sadd.s32 %s57, 9
      %s497 = sld [smem:[#allocation5 + %s496]]
      %s498 = scalar_lea.vmem %s1, %s497
      %s499 = scalar_lea.vmem [#allocation2], 9
      %s500 = scalar_lea.sflag [#allocation3], 9
      %p502 = scmp.lt.u32.totalorder 1, 8
      %p503 = pneg %p502
      // Predicated region
      $region283: #{tpu_custom_call.1} parent=11 // pred_check
        _
      $region284: #{tpu_custom_call.1} parent=11 // pred_check_branch
        %505 = sbr.rel (%p502) target = $region286
      $region285: #{tpu_custom_call.1} parent=11 // pred_region
        %s520 = sand.u32 1, 7
        %p521 = scmp.eq.s32.totalorder %s520, 0
        %p522 = pneg %p521
        // Predicated region
        $region298: #{tpu_custom_call.1} parent=285 // pred_check
          _
        $region299: #{tpu_custom_call.1} parent=285 // pred_check_branch
          %524 = sbr.rel (%p521) target = $region301
        $region300: #{tpu_custom_call.1} parent=285 // pred_region
          %s525 = sand.u32 1, 7
          %s526 = ssub.s32 1, %s525
          %s527 = scalar_lea.vmem %s498, %s526
          %s528 = ssub.s32 1, %s525
          %s529 = scalar_lea.vmem %s499, %s528 [#allocation2]
          %s530 = sshllo.u32 0, %s525
          loop: start=0, step=1, limit=1
          $region302: #{tpu_custom_call.1} parent=300 // loop_pre_header
            _
          $region303: #{tpu_custom_call.1} parent=300 // loop_header
            %s532 = sphi 0, %s536
            %p533 = scmp.ge.s32.totalorder %s532, 1
            %s537 = sphi %s527, %s527
            %s538 = sphi %s529, %s529
          $region304: #{tpu_custom_call.1} parent=300 // loop_header_branch
            %535 = sbr.rel (%p533) target = $region308
          $region305: #{tpu_custom_call.1} parent=300 // loop_body
            %v539 = vld [vmem:[%s537] sm:%s530]
            %540 = vst [vmem:[%s538] sm:%s530] %v539
          $region306: #{tpu_custom_call.1} parent=300 // loop_footer
            %s536 = sadd.s32 1, %s532
          $region307: #{tpu_custom_call.1} parent=300 // loop_footer_branch
            %531 = sbr.rel target = $region303
          $region308: #{tpu_custom_call.1} parent=300 // loop_exit
            _
        $region301: #{tpu_custom_call.1} parent=285 // pred_fallthru
          _
      $region286: #{tpu_custom_call.1} parent=11 // pred_fallthru
        _
      // Predicated region
      $region287: #{tpu_custom_call.1} parent=11 // pred_check
        %p506 = pneg %p502
      $region288: #{tpu_custom_call.1} parent=11 // pred_check_branch
        %508 = sbr.rel (%p506) target = $region290
      $region289: #{tpu_custom_call.1} parent=11 // pred_region
        %s509 = sshllo.u32 0, 1
        loop: start=0, step=1, limit=1
        $region291: #{tpu_custom_call.1} parent=289 // loop_pre_header
          _
        $region292: #{tpu_custom_call.1} parent=289 // loop_header
          %s511 = sphi 0, %s515
          %p512 = scmp.ge.s32.totalorder %s511, 1
          %s516 = sphi %s498, %s498
          %s517 = sphi %s499, %s499
        $region293: #{tpu_custom_call.1} parent=289 // loop_header_branch
          %514 = sbr.rel (%p512) target = $region297
        $region294: #{tpu_custom_call.1} parent=289 // loop_body
          %v518 = vld [vmem:[%s516] sm:%s509]
          %519 = vst [vmem:[%s517] sm:%s509] %v518
        $region295: #{tpu_custom_call.1} parent=289 // loop_footer
          %s515 = sadd.s32 1, %s511
        $region296: #{tpu_custom_call.1} parent=289 // loop_footer_branch
          %510 = sbr.rel target = $region292
        $region297: #{tpu_custom_call.1} parent=289 // loop_exit
          _
      $region290: #{tpu_custom_call.1} parent=11 // pred_fallthru
        _
      // Predicated region
      $region309: #{tpu_custom_call.1} parent=11 // pred_check
        _
      $region310: #{tpu_custom_call.1} parent=11 // pred_check_branch
        %543 = sbr.rel (0) target = $region312
      $region311: #{tpu_custom_call.1} parent=11 // pred_region
        %544 = vsyncadd %s500, 16
      $region312: #{tpu_custom_call.1} parent=11 // pred_fallthru
        _
      %s545 = sadd.s32 %s57, 10
      %s546 = sld [smem:[#allocation5 + %s545]]
      %s547 = scalar_lea.vmem %s1, %s546
      %s548 = scalar_lea.vmem [#allocation2], 10
      %s549 = scalar_lea.sflag [#allocation3], 10
      %p551 = scmp.lt.u32.totalorder 1, 8
      %p552 = pneg %p551
      // Predicated region
      $region313: #{tpu_custom_call.1} parent=11 // pred_check
        _
      $region314: #{tpu_custom_call.1} parent=11 // pred_check_branch
        %554 = sbr.rel (%p551) target = $region316
      $region315: #{tpu_custom_call.1} parent=11 // pred_region
        %s569 = sand.u32 1, 7
        %p570 = scmp.eq.s32.totalorder %s569, 0
        %p571 = pneg %p570
        // Predicated region
        $region328: #{tpu_custom_call.1} parent=315 // pred_check
          _
        $region329: #{tpu_custom_call.1} parent=315 // pred_check_branch
          %573 = sbr.rel (%p570) target = $region331
        $region330: #{tpu_custom_call.1} parent=315 // pred_region
          %s574 = sand.u32 1, 7
          %s575 = ssub.s32 1, %s574
          %s576 = scalar_lea.vmem %s547, %s575
          %s577 = ssub.s32 1, %s574
          %s578 = scalar_lea.vmem %s548, %s577 [#allocation2]
          %s579 = sshllo.u32 0, %s574
          loop: start=0, step=1, limit=1
          $region332: #{tpu_custom_call.1} parent=330 // loop_pre_header
            _
          $region333: #{tpu_custom_call.1} parent=330 // loop_header
            %s581 = sphi 0, %s585
            %p582 = scmp.ge.s32.totalorder %s581, 1
            %s586 = sphi %s576, %s576
            %s587 = sphi %s578, %s578
          $region334: #{tpu_custom_call.1} parent=330 // loop_header_branch
            %584 = sbr.rel (%p582) target = $region338
          $region335: #{tpu_custom_call.1} parent=330 // loop_body
            %v588 = vld [vmem:[%s586] sm:%s579]
            %589 = vst [vmem:[%s587] sm:%s579] %v588
          $region336: #{tpu_custom_call.1} parent=330 // loop_footer
            %s585 = sadd.s32 1, %s581
          $region337: #{tpu_custom_call.1} parent=330 // loop_footer_branch
            %580 = sbr.rel target = $region333
          $region338: #{tpu_custom_call.1} parent=330 // loop_exit
            _
        $region331: #{tpu_custom_call.1} parent=315 // pred_fallthru
          _
      $region316: #{tpu_custom_call.1} parent=11 // pred_fallthru
        _
      // Predicated region
      $region317: #{tpu_custom_call.1} parent=11 // pred_check
        %p555 = pneg %p551
      $region318: #{tpu_custom_call.1} parent=11 // pred_check_branch
        %557 = sbr.rel (%p555) target = $region320
      $region319: #{tpu_custom_call.1} parent=11 // pred_region
        %s558 = sshllo.u32 0, 1
        loop: start=0, step=1, limit=1
        $region321: #{tpu_custom_call.1} parent=319 // loop_pre_header
          _
        $region322: #{tpu_custom_call.1} parent=319 // loop_header
          %s560 = sphi 0, %s564
          %p561 = scmp.ge.s32.totalorder %s560, 1
          %s565 = sphi %s547, %s547
          %s566 = sphi %s548, %s548
        $region323: #{tpu_custom_call.1} parent=319 // loop_header_branch
          %563 = sbr.rel (%p561) target = $region327
        $region324: #{tpu_custom_call.1} parent=319 // loop_body
          %v567 = vld [vmem:[%s565] sm:%s558]
          %568 = vst [vmem:[%s566] sm:%s558] %v567
        $region325: #{tpu_custom_call.1} parent=319 // loop_footer
          %s564 = sadd.s32 1, %s560
        $region326: #{tpu_custom_call.1} parent=319 // loop_footer_branch
          %559 = sbr.rel target = $region322
        $region327: #{tpu_custom_call.1} parent=319 // loop_exit
          _
      $region320: #{tpu_custom_call.1} parent=11 // pred_fallthru
        _
      // Predicated region
      $region339: #{tpu_custom_call.1} parent=11 // pred_check
        _
      $region340: #{tpu_custom_call.1} parent=11 // pred_check_branch
        %592 = sbr.rel (0) target = $region342
      $region341: #{tpu_custom_call.1} parent=11 // pred_region
        %593 = vsyncadd %s549, 16
      $region342: #{tpu_custom_call.1} parent=11 // pred_fallthru
        _
      %s594 = sadd.s32 %s57, 11
      %s595 = sld [smem:[#allocation5 + %s594]]
      %s596 = scalar_lea.vmem %s1, %s595
      %s597 = scalar_lea.vmem [#allocation2], 11
      %s598 = scalar_lea.sflag [#allocation3], 11
      %p600 = scmp.lt.u32.totalorder 1, 8
      %p601 = pneg %p600
      // Predicated region
      $region343: #{tpu_custom_call.1} parent=11 // pred_check
        _
      $region344: #{tpu_custom_call.1} parent=11 // pred_check_branch
        %603 = sbr.rel (%p600) target = $region346
      $region345: #{tpu_custom_call.1} parent=11 // pred_region
        %s618 = sand.u32 1, 7
        %p619 = scmp.eq.s32.totalorder %s618, 0
        %p620 = pneg %p619
        // Predicated region
        $region358: #{tpu_custom_call.1} parent=345 // pred_check
          _
        $region359: #{tpu_custom_call.1} parent=345 // pred_check_branch
          %622 = sbr.rel (%p619) target = $region361
        $region360: #{tpu_custom_call.1} parent=345 // pred_region
          %s623 = sand.u32 1, 7
          %s624 = ssub.s32 1, %s623
          %s625 = scalar_lea.vmem %s596, %s624
          %s626 = ssub.s32 1, %s623
          %s627 = scalar_lea.vmem %s597, %s626 [#allocation2]
          %s628 = sshllo.u32 0, %s623
          loop: start=0, step=1, limit=1
          $region362: #{tpu_custom_call.1} parent=360 // loop_pre_header
            _
          $region363: #{tpu_custom_call.1} parent=360 // loop_header
            %s630 = sphi 0, %s634
            %p631 = scmp.ge.s32.totalorder %s630, 1
            %s635 = sphi %s625, %s625
            %s636 = sphi %s627, %s627
          $region364: #{tpu_custom_call.1} parent=360 // loop_header_branch
            %633 = sbr.rel (%p631) target = $region368
          $region365: #{tpu_custom_call.1} parent=360 // loop_body
            %v637 = vld [vmem:[%s635] sm:%s628]
            %638 = vst [vmem:[%s636] sm:%s628] %v637
          $region366: #{tpu_custom_call.1} parent=360 // loop_footer
            %s634 = sadd.s32 1, %s630
          $region367: #{tpu_custom_call.1} parent=360 // loop_footer_branch
            %629 = sbr.rel target = $region363
          $region368: #{tpu_custom_call.1} parent=360 // loop_exit
            _
        $region361: #{tpu_custom_call.1} parent=345 // pred_fallthru
          _
      $region346: #{tpu_custom_call.1} parent=11 // pred_fallthru
        _
      // Predicated region
      $region347: #{tpu_custom_call.1} parent=11 // pred_check
        %p604 = pneg %p600
      $region348: #{tpu_custom_call.1} parent=11 // pred_check_branch
        %606 = sbr.rel (%p604) target = $region350
      $region349: #{tpu_custom_call.1} parent=11 // pred_region
        %s607 = sshllo.u32 0, 1
        loop: start=0, step=1, limit=1
        $region351: #{tpu_custom_call.1} parent=349 // loop_pre_header
          _
        $region352: #{tpu_custom_call.1} parent=349 // loop_header
          %s609 = sphi 0, %s613
          %p610 = scmp.ge.s32.totalorder %s609, 1
          %s614 = sphi %s596, %s596
          %s615 = sphi %s597, %s597
        $region353: #{tpu_custom_call.1} parent=349 // loop_header_branch
          %612 = sbr.rel (%p610) target = $region357
        $region354: #{tpu_custom_call.1} parent=349 // loop_body
          %v616 = vld [vmem:[%s614] sm:%s607]
          %617 = vst [vmem:[%s615] sm:%s607] %v616
        $region355: #{tpu_custom_call.1} parent=349 // loop_footer
          %s613 = sadd.s32 1, %s609
        $region356: #{tpu_custom_call.1} parent=349 // loop_footer_branch
          %608 = sbr.rel target = $region352
        $region357: #{tpu_custom_call.1} parent=349 // loop_exit
          _
      $region350: #{tpu_custom_call.1} parent=11 // pred_fallthru
        _
      // Predicated region
      $region369: #{tpu_custom_call.1} parent=11 // pred_check
        _
      $region370: #{tpu_custom_call.1} parent=11 // pred_check_branch
        %641 = sbr.rel (0) target = $region372
      $region371: #{tpu_custom_call.1} parent=11 // pred_region
        %642 = vsyncadd %s598, 16
      $region372: #{tpu_custom_call.1} parent=11 // pred_fallthru
        _
      %s643 = sadd.s32 %s57, 12
      %s644 = sld [smem:[#allocation5 + %s643]]
      %s645 = scalar_lea.vmem %s1, %s644
      %s646 = scalar_lea.vmem [#allocation2], 12
      %s647 = scalar_lea.sflag [#allocation3], 12
      %p649 = scmp.lt.u32.totalorder 1, 8
      %p650 = pneg %p649
      // Predicated region
      $region373: #{tpu_custom_call.1} parent=11 // pred_check
        _
      $region374: #{tpu_custom_call.1} parent=11 // pred_check_branch
        %652 = sbr.rel (%p649) target = $region376
      $region375: #{tpu_custom_call.1} parent=11 // pred_region
        %s667 = sand.u32 1, 7
        %p668 = scmp.eq.s32.totalorder %s667, 0
        %p669 = pneg %p668
        // Predicated region
        $region388: #{tpu_custom_call.1} parent=375 // pred_check
          _
        $region389: #{tpu_custom_call.1} parent=375 // pred_check_branch
          %671 = sbr.rel (%p668) target = $region391
        $region390: #{tpu_custom_call.1} parent=375 // pred_region
          %s672 = sand.u32 1, 7
          %s673 = ssub.s32 1, %s672
          %s674 = scalar_lea.vmem %s645, %s673
          %s675 = ssub.s32 1, %s672
          %s676 = scalar_lea.vmem %s646, %s675 [#allocation2]
          %s677 = sshllo.u32 0, %s672
          loop: start=0, step=1, limit=1
          $region392: #{tpu_custom_call.1} parent=390 // loop_pre_header
            _
          $region393: #{tpu_custom_call.1} parent=390 // loop_header
            %s679 = sphi 0, %s683
            %p680 = scmp.ge.s32.totalorder %s679, 1
            %s684 = sphi %s674, %s674
            %s685 = sphi %s676, %s676
          $region394: #{tpu_custom_call.1} parent=390 // loop_header_branch
            %682 = sbr.rel (%p680) target = $region398
          $region395: #{tpu_custom_call.1} parent=390 // loop_body
            %v686 = vld [vmem:[%s684] sm:%s677]
            %687 = vst [vmem:[%s685] sm:%s677] %v686
          $region396: #{tpu_custom_call.1} parent=390 // loop_footer
            %s683 = sadd.s32 1, %s679
          $region397: #{tpu_custom_call.1} parent=390 // loop_footer_branch
            %678 = sbr.rel target = $region393
          $region398: #{tpu_custom_call.1} parent=390 // loop_exit
            _
        $region391: #{tpu_custom_call.1} parent=375 // pred_fallthru
          _
      $region376: #{tpu_custom_call.1} parent=11 // pred_fallthru
        _
      // Predicated region
      $region377: #{tpu_custom_call.1} parent=11 // pred_check
        %p653 = pneg %p649
      $region378: #{tpu_custom_call.1} parent=11 // pred_check_branch
        %655 = sbr.rel (%p653) target = $region380
      $region379: #{tpu_custom_call.1} parent=11 // pred_region
        %s656 = sshllo.u32 0, 1
        loop: start=0, step=1, limit=1
        $region381: #{tpu_custom_call.1} parent=379 // loop_pre_header
          _
        $region382: #{tpu_custom_call.1} parent=379 // loop_header
          %s658 = sphi 0, %s662
          %p659 = scmp.ge.s32.totalorder %s658, 1
          %s663 = sphi %s645, %s645
          %s664 = sphi %s646, %s646
        $region383: #{tpu_custom_call.1} parent=379 // loop_header_branch
          %661 = sbr.rel (%p659) target = $region387
        $region384: #{tpu_custom_call.1} parent=379 // loop_body
          %v665 = vld [vmem:[%s663] sm:%s656]
          %666 = vst [vmem:[%s664] sm:%s656] %v665
        $region385: #{tpu_custom_call.1} parent=379 // loop_footer
          %s662 = sadd.s32 1, %s658
        $region386: #{tpu_custom_call.1} parent=379 // loop_footer_branch
          %657 = sbr.rel target = $region382
        $region387: #{tpu_custom_call.1} parent=379 // loop_exit
          _
      $region380: #{tpu_custom_call.1} parent=11 // pred_fallthru
        _
      // Predicated region
      $region399: #{tpu_custom_call.1} parent=11 // pred_check
        _
      $region400: #{tpu_custom_call.1} parent=11 // pred_check_branch
        %690 = sbr.rel (0) target = $region402
      $region401: #{tpu_custom_call.1} parent=11 // pred_region
        %691 = vsyncadd %s647, 16
      $region402: #{tpu_custom_call.1} parent=11 // pred_fallthru
        _
      %s692 = sadd.s32 %s57, 13
      %s693 = sld [smem:[#allocation5 + %s692]]
      %s694 = scalar_lea.vmem %s1, %s693
      %s695 = scalar_lea.vmem [#allocation2], 13
      %s696 = scalar_lea.sflag [#allocation3], 13
      %p698 = scmp.lt.u32.totalorder 1, 8
      %p699 = pneg %p698
      // Predicated region
      $region403: #{tpu_custom_call.1} parent=11 // pred_check
        _
      $region404: #{tpu_custom_call.1} parent=11 // pred_check_branch
        %701 = sbr.rel (%p698) target = $region406
      $region405: #{tpu_custom_call.1} parent=11 // pred_region
        %s716 = sand.u32 1, 7
        %p717 = scmp.eq.s32.totalorder %s716, 0
        %p718 = pneg %p717
        // Predicated region
        $region418: #{tpu_custom_call.1} parent=405 // pred_check
          _
        $region419: #{tpu_custom_call.1} parent=405 // pred_check_branch
          %720 = sbr.rel (%p717) target = $region421
        $region420: #{tpu_custom_call.1} parent=405 // pred_region
          %s721 = sand.u32 1, 7
          %s722 = ssub.s32 1, %s721
          %s723 = scalar_lea.vmem %s694, %s722
          %s724 = ssub.s32 1, %s721
          %s725 = scalar_lea.vmem %s695, %s724 [#allocation2]
          %s726 = sshllo.u32 0, %s721
          loop: start=0, step=1, limit=1
          $region422: #{tpu_custom_call.1} parent=420 // loop_pre_header
            _
          $region423: #{tpu_custom_call.1} parent=420 // loop_header
            %s728 = sphi 0, %s732
            %p729 = scmp.ge.s32.totalorder %s728, 1
            %s733 = sphi %s723, %s723
            %s734 = sphi %s725, %s725
          $region424: #{tpu_custom_call.1} parent=420 // loop_header_branch
            %731 = sbr.rel (%p729) target = $region428
          $region425: #{tpu_custom_call.1} parent=420 // loop_body
            %v735 = vld [vmem:[%s733] sm:%s726]
            %736 = vst [vmem:[%s734] sm:%s726] %v735
          $region426: #{tpu_custom_call.1} parent=420 // loop_footer
            %s732 = sadd.s32 1, %s728
          $region427: #{tpu_custom_call.1} parent=420 // loop_footer_branch
            %727 = sbr.rel target = $region423
          $region428: #{tpu_custom_call.1} parent=420 // loop_exit
            _
        $region421: #{tpu_custom_call.1} parent=405 // pred_fallthru
          _
      $region406: #{tpu_custom_call.1} parent=11 // pred_fallthru
        _
      // Predicated region
      $region407: #{tpu_custom_call.1} parent=11 // pred_check
        %p702 = pneg %p698
      $region408: #{tpu_custom_call.1} parent=11 // pred_check_branch
        %704 = sbr.rel (%p702) target = $region410
      $region409: #{tpu_custom_call.1} parent=11 // pred_region
        %s705 = sshllo.u32 0, 1
        loop: start=0, step=1, limit=1
        $region411: #{tpu_custom_call.1} parent=409 // loop_pre_header
          _
        $region412: #{tpu_custom_call.1} parent=409 // loop_header
          %s707 = sphi 0, %s711
          %p708 = scmp.ge.s32.totalorder %s707, 1
          %s712 = sphi %s694, %s694
          %s713 = sphi %s695, %s695
        $region413: #{tpu_custom_call.1} parent=409 // loop_header_branch
          %710 = sbr.rel (%p708) target = $region417
        $region414: #{tpu_custom_call.1} parent=409 // loop_body
          %v714 = vld [vmem:[%s712] sm:%s705]
          %715 = vst [vmem:[%s713] sm:%s705] %v714
        $region415: #{tpu_custom_call.1} parent=409 // loop_footer
          %s711 = sadd.s32 1, %s707
        $region416: #{tpu_custom_call.1} parent=409 // loop_footer_branch
          %706 = sbr.rel target = $region412
        $region417: #{tpu_custom_call.1} parent=409 // loop_exit
          _
      $region410: #{tpu_custom_call.1} parent=11 // pred_fallthru
        _
      // Predicated region
      $region429: #{tpu_custom_call.1} parent=11 // pred_check
        _
      $region430: #{tpu_custom_call.1} parent=11 // pred_check_branch
        %739 = sbr.rel (0) target = $region432
      $region431: #{tpu_custom_call.1} parent=11 // pred_region
        %740 = vsyncadd %s696, 16
      $region432: #{tpu_custom_call.1} parent=11 // pred_fallthru
        _
      %s741 = sadd.s32 %s57, 14
      %s742 = sld [smem:[#allocation5 + %s741]]
      %s743 = scalar_lea.vmem %s1, %s742
      %s744 = scalar_lea.vmem [#allocation2], 14
      %s745 = scalar_lea.sflag [#allocation3], 14
      %p747 = scmp.lt.u32.totalorder 1, 8
      %p748 = pneg %p747
      // Predicated region
      $region433: #{tpu_custom_call.1} parent=11 // pred_check
        _
      $region434: #{tpu_custom_call.1} parent=11 // pred_check_branch
        %750 = sbr.rel (%p747) target = $region436
      $region435: #{tpu_custom_call.1} parent=11 // pred_region
        %s765 = sand.u32 1, 7
        %p766 = scmp.eq.s32.totalorder %s765, 0
        %p767 = pneg %p766
        // Predicated region
        $region448: #{tpu_custom_call.1} parent=435 // pred_check
          _
        $region449: #{tpu_custom_call.1} parent=435 // pred_check_branch
          %769 = sbr.rel (%p766) target = $region451
        $region450: #{tpu_custom_call.1} parent=435 // pred_region
          %s770 = sand.u32 1, 7
          %s771 = ssub.s32 1, %s770
          %s772 = scalar_lea.vmem %s743, %s771
          %s773 = ssub.s32 1, %s770
          %s774 = scalar_lea.vmem %s744, %s773 [#allocation2]
          %s775 = sshllo.u32 0, %s770
          loop: start=0, step=1, limit=1
          $region452: #{tpu_custom_call.1} parent=450 // loop_pre_header
            _
          $region453: #{tpu_custom_call.1} parent=450 // loop_header
            %s777 = sphi 0, %s781
            %p778 = scmp.ge.s32.totalorder %s777, 1
            %s782 = sphi %s772, %s772
            %s783 = sphi %s774, %s774
          $region454: #{tpu_custom_call.1} parent=450 // loop_header_branch
            %780 = sbr.rel (%p778) target = $region458
          $region455: #{tpu_custom_call.1} parent=450 // loop_body
            %v784 = vld [vmem:[%s782] sm:%s775]
            %785 = vst [vmem:[%s783] sm:%s775] %v784
          $region456: #{tpu_custom_call.1} parent=450 // loop_footer
            %s781 = sadd.s32 1, %s777
          $region457: #{tpu_custom_call.1} parent=450 // loop_footer_branch
            %776 = sbr.rel target = $region453
          $region458: #{tpu_custom_call.1} parent=450 // loop_exit
            _
        $region451: #{tpu_custom_call.1} parent=435 // pred_fallthru
          _
      $region436: #{tpu_custom_call.1} parent=11 // pred_fallthru
        _
      // Predicated region
      $region437: #{tpu_custom_call.1} parent=11 // pred_check
        %p751 = pneg %p747
      $region438: #{tpu_custom_call.1} parent=11 // pred_check_branch
        %753 = sbr.rel (%p751) target = $region440
      $region439: #{tpu_custom_call.1} parent=11 // pred_region
        %s754 = sshllo.u32 0, 1
        loop: start=0, step=1, limit=1
        $region441: #{tpu_custom_call.1} parent=439 // loop_pre_header
          _
        $region442: #{tpu_custom_call.1} parent=439 // loop_header
          %s756 = sphi 0, %s760
          %p757 = scmp.ge.s32.totalorder %s756, 1
          %s761 = sphi %s743, %s743
          %s762 = sphi %s744, %s744
        $region443: #{tpu_custom_call.1} parent=439 // loop_header_branch
          %759 = sbr.rel (%p757) target = $region447
        $region444: #{tpu_custom_call.1} parent=439 // loop_body
          %v763 = vld [vmem:[%s761] sm:%s754]
          %764 = vst [vmem:[%s762] sm:%s754] %v763
        $region445: #{tpu_custom_call.1} parent=439 // loop_footer
          %s760 = sadd.s32 1, %s756
        $region446: #{tpu_custom_call.1} parent=439 // loop_footer_branch
          %755 = sbr.rel target = $region442
        $region447: #{tpu_custom_call.1} parent=439 // loop_exit
          _
      $region440: #{tpu_custom_call.1} parent=11 // pred_fallthru
        _
      // Predicated region
      $region459: #{tpu_custom_call.1} parent=11 // pred_check
        _
      $region460: #{tpu_custom_call.1} parent=11 // pred_check_branch
        %788 = sbr.rel (0) target = $region462
      $region461: #{tpu_custom_call.1} parent=11 // pred_region
        %789 = vsyncadd %s745, 16
      $region462: #{tpu_custom_call.1} parent=11 // pred_fallthru
        _
      %s790 = sadd.s32 %s57, 15
      %s791 = sld [smem:[#allocation5 + %s790]]
      %s792 = scalar_lea.vmem %s1, %s791
      %s793 = scalar_lea.vmem [#allocation2], 15
      %s794 = scalar_lea.sflag [#allocation3], 15
      %p796 = scmp.lt.u32.totalorder 1, 8
      %p797 = pneg %p796
      // Predicated region
      $region463: #{tpu_custom_call.1} parent=11 // pred_check
        _
      $region464: #{tpu_custom_call.1} parent=11 // pred_check_branch
        %799 = sbr.rel (%p796) target = $region466
      $region465: #{tpu_custom_call.1} parent=11 // pred_region
        %s814 = sand.u32 1, 7
        %p815 = scmp.eq.s32.totalorder %s814, 0
        %p816 = pneg %p815
        // Predicated region
        $region478: #{tpu_custom_call.1} parent=465 // pred_check
          _
        $region479: #{tpu_custom_call.1} parent=465 // pred_check_branch
          %818 = sbr.rel (%p815) target = $region481
        $region480: #{tpu_custom_call.1} parent=465 // pred_region
          %s819 = sand.u32 1, 7
          %s820 = ssub.s32 1, %s819
          %s821 = scalar_lea.vmem %s792, %s820
          %s822 = ssub.s32 1, %s819
          %s823 = scalar_lea.vmem %s793, %s822 [#allocation2]
          %s824 = sshllo.u32 0, %s819
          loop: start=0, step=1, limit=1
          $region482: #{tpu_custom_call.1} parent=480 // loop_pre_header
            _
          $region483: #{tpu_custom_call.1} parent=480 // loop_header
            %s826 = sphi 0, %s830
            %p827 = scmp.ge.s32.totalorder %s826, 1
            %s831 = sphi %s821, %s821
            %s832 = sphi %s823, %s823
          $region484: #{tpu_custom_call.1} parent=480 // loop_header_branch
            %829 = sbr.rel (%p827) target = $region488
          $region485: #{tpu_custom_call.1} parent=480 // loop_body
            %v833 = vld [vmem:[%s831] sm:%s824]
            %834 = vst [vmem:[%s832] sm:%s824] %v833
          $region486: #{tpu_custom_call.1} parent=480 // loop_footer
            %s830 = sadd.s32 1, %s826
          $region487: #{tpu_custom_call.1} parent=480 // loop_footer_branch
            %825 = sbr.rel target = $region483
          $region488: #{tpu_custom_call.1} parent=480 // loop_exit
            _
        $region481: #{tpu_custom_call.1} parent=465 // pred_fallthru
          _
      $region466: #{tpu_custom_call.1} parent=11 // pred_fallthru
        _
      // Predicated region
      $region467: #{tpu_custom_call.1} parent=11 // pred_check
        %p800 = pneg %p796
      $region468: #{tpu_custom_call.1} parent=11 // pred_check_branch
        %802 = sbr.rel (%p800) target = $region470
      $region469: #{tpu_custom_call.1} parent=11 // pred_region
        %s803 = sshllo.u32 0, 1
        loop: start=0, step=1, limit=1
        $region471: #{tpu_custom_call.1} parent=469 // loop_pre_header
          _
        $region472: #{tpu_custom_call.1} parent=469 // loop_header
          %s805 = sphi 0, %s809
          %p806 = scmp.ge.s32.totalorder %s805, 1
          %s810 = sphi %s792, %s792
          %s811 = sphi %s793, %s793
        $region473: #{tpu_custom_call.1} parent=469 // loop_header_branch
          %808 = sbr.rel (%p806) target = $region477
        $region474: #{tpu_custom_call.1} parent=469 // loop_body
          %v812 = vld [vmem:[%s810] sm:%s803]
          %813 = vst [vmem:[%s811] sm:%s803] %v812
        $region475: #{tpu_custom_call.1} parent=469 // loop_footer
          %s809 = sadd.s32 1, %s805
        $region476: #{tpu_custom_call.1} parent=469 // loop_footer_branch
          %804 = sbr.rel target = $region472
        $region477: #{tpu_custom_call.1} parent=469 // loop_exit
          _
      $region470: #{tpu_custom_call.1} parent=11 // pred_fallthru
        _
      // Predicated region
      $region489: #{tpu_custom_call.1} parent=11 // pred_check
        _
      $region490: #{tpu_custom_call.1} parent=11 // pred_check_branch
        %837 = sbr.rel (0) target = $region492
      $region491: #{tpu_custom_call.1} parent=11 // pred_region
        %838 = vsyncadd %s794, 16
      $region492: #{tpu_custom_call.1} parent=11 // pred_fallthru
        _
      %s839 = smul.u32 1, 1
      %s840 = sshll.u32 %s839, 4
      %841 = dma.done [#allocation3], %s840
      %s842 = sshll.u32 %s839, 4
      %843 = dma.done %s108, %s842
      %s844 = sshll.u32 %s839, 4
      %845 = dma.done %s157, %s844
      %s846 = sshll.u32 %s839, 4
      %847 = dma.done %s206, %s846
      %s848 = sshll.u32 %s839, 4
      %849 = dma.done %s255, %s848
      %s850 = sshll.u32 %s839, 4
      %851 = dma.done %s304, %s850
      %s852 = sshll.u32 %s839, 4
      %853 = dma.done %s353, %s852
      %s854 = sshll.u32 %s839, 4
      %855 = dma.done %s402, %s854
      %s856 = sshll.u32 %s839, 4
      %857 = dma.done %s451, %s856
      %s858 = sshll.u32 %s839, 4
      %859 = dma.done %s500, %s858
      %s860 = sshll.u32 %s839, 4
      %861 = dma.done %s549, %s860
      %s862 = sshll.u32 %s839, 4
      %863 = dma.done %s598, %s862
      %s864 = sshll.u32 %s839, 4
      %865 = dma.done %s647, %s864
      %s866 = sshll.u32 %s839, 4
      %867 = dma.done %s696, %s866
      %s868 = sshll.u32 %s839, 4
      %869 = dma.done %s745, %s868
      %s870 = sshll.u32 %s839, 4
      %871 = dma.done %s794, %s870
      %v872 = vld [vmem:[#allocation2] sm:$0xff]
      %v873 = vld [vmem:[#allocation2 + $0x8] sm:$0xff]
      %vm874 = vcmask 130048
      %875 = vst.msk [vmem:[%s55] sm:$0xff] %vm874, %v872
      %876 = vst.msk [vmem:[%s55 + $0x8] sm:$0xff] %vm874, %v873
      %s877 = smul.u32 2, %s14
      %p878 = scmp.lt.s32.totalorder %s877, 3
      %s879 = scalar_select %p878, %s877, 3
      %s880 = smul.addr %s879, 8
      %s881 = scalar_lea.vmem %s2, %s880
      // Predicated region
      $region493: #{tpu_custom_call.1} parent=11 // pred_check
        %p882 = pneg %p29
      $region494: #{tpu_custom_call.1} parent=11 // pred_check_branch
        %884 = sbr.rel (%p882) target = $region496
      $region495: #{tpu_custom_call.1} parent=11 // pred_region
        %s885 = smul.u32 2, %s14
      $region496: #{tpu_custom_call.1} parent=11 // pred_fallthru
        _
    $region12: #{tpu_custom_call.1} parent=5 // pred_fallthru
      _
    %p886 = scmp.le.s32.totalorder 1, %s14
    // Predicated region
    $region497: #{tpu_custom_call.1} parent=5 // pred_check
      %p887 = pneg %p886
    $region498: #{tpu_custom_call.1} parent=5 // pred_check_branch
      %889 = sbr.rel (%p887) target = $region500
    $region499: #{tpu_custom_call.1} parent=5 // pred_region
      %s890 = ssub.s32 %s14, 1
      // Predicated region
      $region501: #{tpu_custom_call.1} parent=499 // pred_check
        %p891 = pneg %p35
      $region502: #{tpu_custom_call.1} parent=499 // pred_check_branch
        %893 = sbr.rel (%p891) target = $region504
      $region503: #{tpu_custom_call.1} parent=499 // pred_region
        %s894 = smul.u32 2, %s19
        %p895 = scmp.lt.s32.totalorder %s894, 3
        %s896 = scalar_select %p895, %s894, 3
        %s897 = smul.addr %s896, 8
        %s898 = scalar_lea.vmem %s2, %s897
      $region504: #{tpu_custom_call.1} parent=499 // pred_fallthru
        _
    $region500: #{tpu_custom_call.1} parent=5 // pred_fallthru
      _
  $region6: #{tpu_custom_call.1} parent=0 // loop_footer
    %s18 = sadd.s32 1, %s14
  $region7: #{tpu_custom_call.1} parent=0 // loop_footer_branch
    %13 = sbr.rel target = $region3
  $region8: #{tpu_custom_call.1} parent=0 // loop_exit
    _
  %899 = vsyncmov [#allocation3]
  %s900 = vpop.sfrf %899
  %p901 = scmp.eq.s32.totalorder %s900, 0
  %p902 = pneg %p901
  %904 = shalt.err (%p902)
  %s905 = scalar_lea.sflag [#allocation3], 1
  %906 = vsyncmov %s905
  %s907 = vpop.sfrf %906
  %p908 = scmp.eq.s32.totalorder %s907, 0
  %p909 = pneg %p908
  %911 = shalt.err (%p909)
  %s912 = scalar_lea.sflag [#allocation3], 2
  %913 = vsyncmov %s912
  %s914 = vpop.sfrf %913
  %p915 = scmp.eq.s32.totalorder %s914, 0
  %p916 = pneg %p915
  %918 = shalt.err (%p916)
  %s919 = scalar_lea.sflag [#allocation3], 3
  %920 = vsyncmov %s919
  %s921 = vpop.sfrf %920
  %p922 = scmp.eq.s32.totalorder %s921, 0
  %p923 = pneg %p922
  %925 = shalt.err (%p923)
  %s926 = scalar_lea.sflag [#allocation3], 4
  %927 = vsyncmov %s926
  %s928 = vpop.sfrf %927
  %p929 = scmp.eq.s32.totalorder %s928, 0
  %p930 = pneg %p929
  %932 = shalt.err (%p930)
  %s933 = scalar_lea.sflag [#allocation3], 5
  %934 = vsyncmov %s933
  %s935 = vpop.sfrf %934
  %p936 = scmp.eq.s32.totalorder %s935, 0
  %p937 = pneg %p936
  %939 = shalt.err (%p937)
  %s940 = scalar_lea.sflag [#allocation3], 6
  %941 = vsyncmov %s940
  %s942 = vpop.sfrf %941
  %p943 = scmp.eq.s32.totalorder %s942, 0
  %p944 = pneg %p943
  %946 = shalt.err (%p944)
  %s947 = scalar_lea.sflag [#allocation3], 7
  %948 = vsyncmov %s947
  %s949 = vpop.sfrf %948
  %p950 = scmp.eq.s32.totalorder %s949, 0
  %p951 = pneg %p950
  %953 = shalt.err (%p951)
  %s954 = scalar_lea.sflag [#allocation3], 8
  %955 = vsyncmov %s954
  %s956 = vpop.sfrf %955
  %p957 = scmp.eq.s32.totalorder %s956, 0
  %p958 = pneg %p957
  %960 = shalt.err (%p958)
  %s961 = scalar_lea.sflag [#allocation3], 9
  %962 = vsyncmov %s961
  %s963 = vpop.sfrf %962
  %p964 = scmp.eq.s32.totalorder %s963, 0
  %p965 = pneg %p964
  %967 = shalt.err (%p965)
  %s968 = scalar_lea.sflag [#allocation3], 10
  %969 = vsyncmov %s968
  %s970 = vpop.sfrf %969
  %p971 = scmp.eq.s32.totalorder %s970, 0
  %p972 = pneg %p971
  %974 = shalt.err (%p972)
  %s975 = scalar_lea.sflag [#allocation3], 11
  %976 = vsyncmov %s975
  %s977 = vpop.sfrf %976
  %p978 = scmp.eq.s32.totalorder %s977, 0
  %p979 = pneg %p978
  %981 = shalt.err (%p979)
  %s982 = scalar_lea.sflag [#allocation3], 12
  %983 = vsyncmov %s982
  %s984 = vpop.sfrf %983
  %p985 = scmp.eq.s32.totalorder %s984, 0
  %p986 = pneg %p985
  %988 = shalt.err (%p986)
  %s989 = scalar_lea.sflag [#allocation3], 13
  %990 = vsyncmov %s989
  %s991 = vpop.sfrf %990
  %p992 = scmp.eq.s32.totalorder %s991, 0
  %p993 = pneg %p992
  %995 = shalt.err (%p993)
  %s996 = scalar_lea.sflag [#allocation3], 14
  %997 = vsyncmov %s996
  %s998 = vpop.sfrf %997
  %p999 = scmp.eq.s32.totalorder %s998, 0
  %p1000 = pneg %p999
  %1002 = shalt.err (%p1000)
  %s1003 = scalar_lea.sflag [#allocation3], 15
  %1004 = vsyncmov %s1003
  %s1005 = vpop.sfrf %1004
  %p1006 = scmp.eq.s32.totalorder %s1005, 0
  %p1007 = pneg %p1006
  %1009 = shalt.err (%p1007)

</llo_original>
